<compile_context>
chip_gen: v5e
topology: v5e:2x2
jax: 0.10.0
libtpu: 0.0.40
codegen_flags: <defaults>
</compile_context>

<pallas_src>
import jax
import jax.numpy as jnp
from jax.experimental import pallas as pl
from jax.experimental.pallas import tpu as pltpu

LANE = 128
SUBLANE = 8
NEG_INF = -1e30  # masks padded class lanes out of log_softmax


def _round_up(x, m):
    return ((x + m - 1) // m) * m


def gcn_kernel(x_ref, a_ref,
               w1_ref, wc1_ref, wc2_ref, w2_ref,
               bh_ref, b2_ref,
               out_ref):
    """Fused GCN forward on a packed chunk of graphs.

    x_ref : (M, F_pad)  bf16, M = B_chunk * n_p packed node rows
    a_ref : (M, M)      bf16, block-diagonal normalized adjacency
    bh_ref: (8, H_pad)  f32,  rows 0/1/2 = b1 / bc1 / bc2
    """
    x = x_ref[...]
    a = a_ref[...]
    b1 = bh_ref[0:1, :]
    bc1 = bh_ref[1:2, :]
    bc2 = bh_ref[2:3, :]

    # first_lin + ReLU (dropout is identity in eval mode)
    h = jnp.dot(x, w1_ref[...], preferred_element_type=jnp.float32) + b1
    h = jnp.maximum(h, 0.0)

    # GCNConv layer 1: relu(A_hat @ (h @ Wc1) + bc1)
    t = jnp.dot(h.astype(jnp.bfloat16), wc1_ref[...],
                preferred_element_type=jnp.float32)
    h = jnp.dot(a, t.astype(jnp.bfloat16),
                preferred_element_type=jnp.float32) + bc1
    h = jnp.maximum(h, 0.0)

    # GCNConv layer 2
    t = jnp.dot(h.astype(jnp.bfloat16), wc2_ref[...],
                preferred_element_type=jnp.float32)
    h = jnp.dot(a, t.astype(jnp.bfloat16),
                preferred_element_type=jnp.float32) + bc2
    h = jnp.maximum(h, 0.0)

    # lin2 (padded class lanes carry a -1e30 f32 bias -> vanish under softmax)
    logits = jnp.dot(h.astype(jnp.bfloat16), w2_ref[...],
                     preferred_element_type=jnp.float32) + b2_ref[...]

    # log_softmax along the (padded, lane-dense) class axis
    m = jnp.max(logits, axis=-1, keepdims=True)
    s = logits - m
    lse = jnp.log(jnp.sum(jnp.exp(s), axis=-1, keepdims=True))
    out_ref[...] = s - lse


def _block_diag_pack(blocks):
    """(b_chunk, n, n) per-graph adjacencies -> (b_chunk*n, b_chunk*n) block-diag."""
    bc, n, _ = blocks.shape
    eye = jnp.eye(bc, dtype=blocks.dtype)
    return jnp.einsum('ipq,ij->ipjq', blocks, eye).reshape(bc * n, bc * n)


def gcn_forward(x, a_norm, params, rows_per_step=128):
    """Batched GCN forward with block-diagonal graph packing.

    x:      (B, N, F) float32 node features, one graph per batch entry
    a_norm: (B, N, N) float32 symmetrically-normalized adjacencies
    rows_per_step: target packed M per grid step (128 for v5e/v7x, 256 for v6e)
    """
    (w1, b1), (wc1, bc1), (wc2, bc2), (w2, b2) = params
    B, N, F = x.shape
    H = w1.shape[1]
    C = w2.shape[1]

    n_p = _round_up(N, SUBLANE)
    f_p = _round_up(F, LANE)
    h_p = _round_up(H, LANE)
    c_p = _round_up(C, LANE)

    # ---- choose how many graphs to pack per grid step -----------------------
    b_chunk = max(1, rows_per_step // n_p)
    # keep >= 2 grid steps so v7x's two TensorCores both get a batch chunk
    while b_chunk > 1 and pl.cdiv(B, b_chunk) < 2:
        b_chunk //= 2
    b_pad = _round_up(B, b_chunk)
    num_chunks = b_pad // b_chunk
    m_pack = b_chunk * n_p

    def pad2(m2, rows, cols, fill=0.0):
        return jnp.pad(m2, ((0, rows - m2.shape[0]), (0, cols - m2.shape[1])),
                       constant_values=fill)

    # ---- pack node features: (num_chunks, m_pack, f_p) bf16 ------------------
    x_p = jnp.pad(x, ((0, b_pad - B), (0, n_p - N), (0, f_p - F)))
    x_p = x_p.reshape(num_chunks, m_pack, f_p).astype(jnp.bfloat16)

    # ---- pack adjacencies block-diagonally: (num_chunks, m_pack, m_pack) ----
    a_p = jnp.pad(a_norm, ((0, b_pad - B), (0, n_p - N), (0, n_p - N)))
    a_p = a_p.reshape(num_chunks, b_chunk, n_p, n_p)
    a_p = jax.vmap(_block_diag_pack)(a_p).astype(jnp.bfloat16)

    # ---- lane-padded bf16 weights; f32 biases (post-accumulation add) -------
    w1_p = pad2(w1, f_p, h_p).astype(jnp.bfloat16)
    wc1_p = pad2(wc1, h_p, h_p).astype(jnp.bfloat16)
    wc2_p = pad2(wc2, h_p, h_p).astype(jnp.bfloat16)
    w2_p = pad2(w2, h_p, c_p).astype(jnp.bfloat16)
    # pack the three hidden-dim biases into one (8, h_p) f32 input
    bh_p = jnp.zeros((SUBLANE, h_p), jnp.float32)
    bh_p = bh_p.at[0, :H].set(b1[0])
    bh_p = bh_p.at[1, :H].set(bc1[0])
    bh_p = bh_p.at[2, :H].set(bc2[0])
    b2_p = pad2(b2, 1, c_p, fill=NEG_INF)   # mask padded class lanes (stays f32)

    def chunk_spec(shape):
        # one packed chunk per grid step; leading chunk dim squeezed out
        return pl.BlockSpec((None,) + shape, lambda g: (g, 0, 0))

    def weight_spec(shape):
        # shared weights: same (full) block every grid step -> stays resident
        return pl.BlockSpec(shape, lambda g: (0, 0))

    in_specs = [
        chunk_spec((m_pack, f_p)),     # packed x
        chunk_spec((m_pack, m_pack)),  # packed block-diag A_hat
        weight_spec((f_p, h_p)),       # w1
        weight_spec((h_p, h_p)),       # wc1
        weight_spec((h_p, h_p)),       # wc2
        weight_spec((h_p, c_p)),       # w2
        weight_spec((SUBLANE, h_p)),   # packed hidden biases
        weight_spec((1, c_p)),         # b2 (with -1e30 padded lanes)
    ]

    # TODO(synk): for a single very large graph this fused design must switch
    # to per-layer row-tiled kernels; the block-diag A_hat (bf16) hits VMEM
    # limits around N~1.5-2k on v7x (64 MiB VMEM, 32 MiB default scoped) vs
    # ~4k on v5e/v6e (v5e default scoped VMEM is only 16 MiB -> raise
    # vmem_limit_bytes there).  At these shapes everything fits comfortably.
    out_packed = pl.pallas_call(
        gcn_kernel,
        out_shape=jax.ShapeDtypeStruct((num_chunks, m_pack, c_p), jnp.float32),
        grid=(num_chunks,),
        in_specs=in_specs,
        out_specs=pl.BlockSpec((None, m_pack, c_p), lambda g: (g, 0, 0)),
        compiler_params=pltpu.CompilerParams(
            dimension_semantics=("parallel",)),
    )(x_p, a_p, w1_p, wc1_p, wc2_p, w2_p, bh_p, b2_p)

    out = out_packed.reshape(b_pad, n_p, c_p)
    return out[:B, :N, :C]


def gcn_reference(x, a_norm, params):
    """Pure-JAX reference with the same bf16-input / f32-accumulate recipe."""
    (w1, b1), (wc1, bc1), (wc2, bc2), (w2, b2) = params
    bf = lambda v: v.astype(jnp.bfloat16)

    def dot(p, q):
        return jnp.dot(bf(p), bf(q), preferred_element_type=jnp.float32)

    def per_graph(xg, ag):
        h = jnp.maximum(dot(xg, w1) + b1, 0.0)
        h = jnp.maximum(dot(ag, dot(h, wc1)) + bc1, 0.0)
        h = jnp.maximum(dot(ag, dot(h, wc2)) + bc2, 0.0)
        logits = dot(h, w2) + b2
        return jax.nn.log_softmax(logits, axis=-1)

    return jax.vmap(per_graph)(x, a_norm)


def build_normalized_adjacency(edge_index, num_nodes):
    """A_hat = D^-1/2 (A + I) D^-1/2, matching PyG gcn_norm with unit weights.

    Duplicate edges accumulate (scatter-add); input self loops are replaced by
    a single weight-1 self loop per node (add_remaining_self_loops behavior).
    """
    src, dst = edge_index[0], edge_index[1]
    not_loop = (src != dst).astype(jnp.float32)
    a = jnp.zeros((num_nodes, num_nodes), jnp.float32)
    # messages flow source -> target: A[dst, src]
    a = a.at[dst, src].add(not_loop)
    a = a + jnp.eye(num_nodes, dtype=jnp.float32)
    deg = jnp.sum(a, axis=1)
    d_inv_sqrt = jnp.where(deg > 0, 1.0 / jnp.sqrt(deg), 0.0)
    return d_inv_sqrt[:, None] * a * d_inv_sqrt[None, :]


def init_params(key, num_node_features, hidden, num_class):
    """Deterministic synthetic parameter init (shapes follow the module)."""
    ks = jax.random.split(key, 8)

    def lin(kw, kb, fan_in, fan_out):
        bound = 1.0 / jnp.sqrt(fan_in)
        w = jax.random.uniform(kw, (fan_in, fan_out), jnp.float32, -bound, bound)
        b = jax.random.uniform(kb, (1, fan_out), jnp.float32, -bound, bound)
        return w, b

    p_first = lin(ks[0], ks[1], num_node_features, hidden)   # first_lin
    p_conv1 = lin(ks[2], ks[3], hidden, hidden)              # convs[0]
    p_conv2 = lin(ks[4], ks[5], hidden, hidden)              # convs[1]
    p_lin2 = lin(ks[6], ks[7], hidden, num_class)            # lin2
    return p_first, p_conv1, p_conv2, p_lin2


if __name__ == "__main__":
    # Small shapes consistent with the module; enough graphs that the packer
    # builds two 128-row chunks (8 graphs x 16 padded nodes per grid step).
    B = 16
    N_NODES = 16
    NUM_NODE_FEATURES = 32
    HIDDEN = 16
    NUM_CLASS = 8
    NUM_EDGES = 40

    key = jax.random.PRNGKey(0)
    k_x, k_e, k_p = jax.random.split(key, 3)

    # data.x for each graph
    x = jax.random.normal(k_x, (B, N_NODES, NUM_NODE_FEATURES), jnp.float32)
    # data.edge_index (2, E) int32 per graph; data.edge_weight is unused by
    # forward (convs are called as conv(x, edge_index)), so weights default 1.
    edge_index = jax.random.randint(k_e, (B, 2, NUM_EDGES), 0, N_NODES, jnp.int32)
    a_norm = jax.vmap(lambda ei: build_normalized_adjacency(ei, N_NODES))(edge_index)

    params = init_params(k_p, NUM_NODE_FEATURES, HIDDEN, NUM_CLASS)

    # TODO(synk): dropout is a no-op in eval mode; training-mode dropout (RNG
    # masking via pltpu.prng_random_bits) is not implemented here.

    out = gcn_forward(x, a_norm, params)
    out = jax.block_until_ready(out)

    ref = gcn_reference(x, a_norm, params)

    assert out.shape == (B, N_NODES, NUM_CLASS)
    row_sums = jnp.sum(jnp.exp(out), axis=-1)
    assert bool(jnp.all(jnp.abs(row_sums - 1.0) < 1e-3))
    assert bool(jnp.max(jnp.abs(out - ref)) < 2e-2)

    print("KERNEL_OK")
</pallas_src>

<mosaic_0001>
module attributes {stable_mosaic.version = 11 : i64} {
  func.func @gcn_kernel(%arg0: i32, %arg1: memref<1x128x128xbf16, #tpu.memory_space<vmem>>, %arg2: memref<1x128x128xbf16, #tpu.memory_space<vmem>>, %arg3: memref<128x128xbf16, #tpu.memory_space<vmem>>, %arg4: memref<128x128xbf16, #tpu.memory_space<vmem>>, %arg5: memref<128x128xbf16, #tpu.memory_space<vmem>>, %arg6: memref<128x128xbf16, #tpu.memory_space<vmem>>, %arg7: memref<8x128xf32, #tpu.memory_space<vmem>>, %arg8: memref<1x128xf32, #tpu.memory_space<vmem>>, %arg9: memref<1x128x128xf32, #tpu.memory_space<vmem>>) attributes {dimension_semantics = [#tpu.dimension_semantics<parallel>], iteration_bounds = array<i64: 2>, scalar_prefetch = 0 : i64, scratch_operands = 0 : i64, tpu.core_type = #tpu.core_type<tc>, window_params = [{transform_indices = @transform_0, window_bounds = array<i64: 1, 128, 128>}, {transform_indices = @transform_1, window_bounds = array<i64: 1, 128, 128>}, {pipeline_mode = #tpu.pipeline_mode<synchronous>, transform_indices = @transform_2, window_bounds = array<i64: 128, 128>}, {pipeline_mode = #tpu.pipeline_mode<synchronous>, transform_indices = @transform_3, window_bounds = array<i64: 128, 128>}, {pipeline_mode = #tpu.pipeline_mode<synchronous>, transform_indices = @transform_4, window_bounds = array<i64: 128, 128>}, {pipeline_mode = #tpu.pipeline_mode<synchronous>, transform_indices = @transform_5, window_bounds = array<i64: 128, 128>}, {pipeline_mode = #tpu.pipeline_mode<synchronous>, transform_indices = @transform_6, window_bounds = array<i64: 8, 128>}, {pipeline_mode = #tpu.pipeline_mode<synchronous>, transform_indices = @transform_7, window_bounds = array<i64: 1, 128>}, {transform_indices = @transform_8, window_bounds = array<i64: 1, 128, 128>}]} {
    %c0 = arith.constant 0 : index
    %c0_0 = arith.constant 0 : index
    %c0_1 = arith.constant 0 : index
    %0 = vector.load %arg1[%c0, %c0_0, %c0_1] : memref<1x128x128xbf16, #tpu.memory_space<vmem>>, vector<1x128x128xbf16>
    %1 = vector.shape_cast %0 : vector<1x128x128xbf16> to vector<128x128xbf16>
    %c0_2 = arith.constant 0 : index
    %c0_3 = arith.constant 0 : index
    %c0_4 = arith.constant 0 : index
    %2 = vector.load %arg2[%c0_2, %c0_3, %c0_4] : memref<1x128x128xbf16, #tpu.memory_space<vmem>>, vector<1x128x128xbf16>
    %3 = vector.shape_cast %2 : vector<1x128x128xbf16> to vector<128x128xbf16>
    %c0_5 = arith.constant 0 : index
    %c0_6 = arith.constant 0 : index
    %4 = vector.load %arg7[%c0_5, %c0_6] : memref<8x128xf32, #tpu.memory_space<vmem>>, vector<1x128xf32>
    %c1 = arith.constant 1 : index
    %c0_7 = arith.constant 0 : index
    %5 = vector.load %arg7[%c1, %c0_7] : memref<8x128xf32, #tpu.memory_space<vmem>>, vector<1x128xf32>
    %c2 = arith.constant 2 : index
    %c0_8 = arith.constant 0 : index
    %6 = vector.load %arg7[%c2, %c0_8] : memref<8x128xf32, #tpu.memory_space<vmem>>, vector<1x128xf32>
    %c0_9 = arith.constant 0 : index
    %c0_10 = arith.constant 0 : index
    %7 = vector.load %arg3[%c0_9, %c0_10] : memref<128x128xbf16, #tpu.memory_space<vmem>>, vector<128x128xbf16>
    %cst = arith.constant dense<0.000000e+00> : vector<128x128xf32>
    %8 = tpu.matmul %1, %7, %cst {dimension_numbers = #tpu.dot_dimension_numbers<[1], [0], [0], [1], [0, 0, 1, 1], [], []>} : vector<128x128xbf16>, vector<128x128xbf16>, vector<128x128xf32> -> vector<128x128xf32>
    %9 = vector.broadcast %4 : vector<1x128xf32> to vector<128x128xf32>
    %10 = arith.addf %8, %9 : vector<128x128xf32>
    %cst_11 = arith.constant 0.000000e+00 : f32
    %11 = vector.broadcast %cst_11 : f32 to vector<128x128xf32>
    %12 = arith.maximumf %10, %11 : vector<128x128xf32>
    %13 = arith.truncf %12 : vector<128x128xf32> to vector<128x128xbf16>
    %c0_12 = arith.constant 0 : index
    %c0_13 = arith.constant 0 : index
    %14 = vector.load %arg4[%c0_12, %c0_13] : memref<128x128xbf16, #tpu.memory_space<vmem>>, vector<128x128xbf16>
    %cst_14 = arith.constant dense<0.000000e+00> : vector<128x128xf32>
    %15 = tpu.matmul %13, %14, %cst_14 {dimension_numbers = #tpu.dot_dimension_numbers<[1], [0], [0], [1], [0, 0, 1, 1], [], []>} : vector<128x128xbf16>, vector<128x128xbf16>, vector<128x128xf32> -> vector<128x128xf32>
    %16 = arith.truncf %15 : vector<128x128xf32> to vector<128x128xbf16>
    %cst_15 = arith.constant dense<0.000000e+00> : vector<128x128xf32>
    %17 = tpu.matmul %3, %16, %cst_15 {dimension_numbers = #tpu.dot_dimension_numbers<[1], [0], [0], [1], [0, 0, 1, 1], [], []>} : vector<128x128xbf16>, vector<128x128xbf16>, vector<128x128xf32> -> vector<128x128xf32>
    %18 = vector.broadcast %5 : vector<1x128xf32> to vector<128x128xf32>
    %19 = arith.addf %17, %18 : vector<128x128xf32>
    %cst_16 = arith.constant 0.000000e+00 : f32
    %20 = vector.broadcast %cst_16 : f32 to vector<128x128xf32>
    %21 = arith.maximumf %19, %20 : vector<128x128xf32>
    %22 = arith.truncf %21 : vector<128x128xf32> to vector<128x128xbf16>
    %c0_17 = arith.constant 0 : index
    %c0_18 = arith.constant 0 : index
    %23 = vector.load %arg5[%c0_17, %c0_18] : memref<128x128xbf16, #tpu.memory_space<vmem>>, vector<128x128xbf16>
    %cst_19 = arith.constant dense<0.000000e+00> : vector<128x128xf32>
    %24 = tpu.matmul %22, %23, %cst_19 {dimension_numbers = #tpu.dot_dimension_numbers<[1], [0], [0], [1], [0, 0, 1, 1], [], []>} : vector<128x128xbf16>, vector<128x128xbf16>, vector<128x128xf32> -> vector<128x128xf32>
    %25 = arith.truncf %24 : vector<128x128xf32> to vector<128x128xbf16>
    %cst_20 = arith.constant dense<0.000000e+00> : vector<128x128xf32>
    %26 = tpu.matmul %3, %25, %cst_20 {dimension_numbers = #tpu.dot_dimension_numbers<[1], [0], [0], [1], [0, 0, 1, 1], [], []>} : vector<128x128xbf16>, vector<128x128xbf16>, vector<128x128xf32> -> vector<128x128xf32>
    %27 = vector.broadcast %6 : vector<1x128xf32> to vector<128x128xf32>
    %28 = arith.addf %26, %27 : vector<128x128xf32>
    %cst_21 = arith.constant 0.000000e+00 : f32
    %29 = vector.broadcast %cst_21 : f32 to vector<128x128xf32>
    %30 = arith.maximumf %28, %29 : vector<128x128xf32>
    %31 = arith.truncf %30 : vector<128x128xf32> to vector<128x128xbf16>
    %c0_22 = arith.constant 0 : index
    %c0_23 = arith.constant 0 : index
    %32 = vector.load %arg6[%c0_22, %c0_23] : memref<128x128xbf16, #tpu.memory_space<vmem>>, vector<128x128xbf16>
    %cst_24 = arith.constant dense<0.000000e+00> : vector<128x128xf32>
    %33 = tpu.matmul %31, %32, %cst_24 {dimension_numbers = #tpu.dot_dimension_numbers<[1], [0], [0], [1], [0, 0, 1, 1], [], []>} : vector<128x128xbf16>, vector<128x128xbf16>, vector<128x128xf32> -> vector<128x128xf32>
    %c0_25 = arith.constant 0 : index
    %c0_26 = arith.constant 0 : index
    %34 = vector.load %arg8[%c0_25, %c0_26] : memref<1x128xf32, #tpu.memory_space<vmem>>, vector<1x128xf32>
    %35 = vector.broadcast %34 : vector<1x128xf32> to vector<128x128xf32>
    %36 = arith.addf %33, %35 : vector<128x128xf32>
    %cst_27 = arith.constant dense<0xFF800000> : vector<128xf32>
    %37 = vector.multi_reduction <maximumf>, %36, %cst_27 [1] : vector<128x128xf32> to vector<128xf32>
    %38 = vector.shape_cast %37 : vector<128xf32> to vector<128x1xf32>
    %39 = vector.broadcast %38 : vector<128x1xf32> to vector<128x128xf32>
    %40 = arith.subf %36, %39 : vector<128x128xf32>
    %41 = math.exp %40 : vector<128x128xf32>
    %cst_28 = arith.constant dense<0.000000e+00> : vector<128xf32>
    %42 = vector.multi_reduction <add>, %41, %cst_28 [1] : vector<128x128xf32> to vector<128xf32>
    %43 = vector.shape_cast %42 : vector<128xf32> to vector<128x1xf32>
    %44 = math.log %43 : vector<128x1xf32>
    %45 = vector.broadcast %44 : vector<128x1xf32> to vector<128x128xf32>
    %46 = arith.subf %40, %45 : vector<128x128xf32>
    %c0_29 = arith.constant 0 : index
    %c0_30 = arith.constant 0 : index
    %c0_31 = arith.constant 0 : index
    %47 = vector.load %arg9[%c0_29, %c0_30, %c0_31] : memref<1x128x128xf32, #tpu.memory_space<vmem>>, vector<1x128x128xf32>
    %48 = vector.shape_cast %47 : vector<1x128x128xf32> to vector<128x128xf32>
    %49 = vector.shape_cast %46 : vector<128x128xf32> to vector<1x128x128xf32>
    tpu.vector_store %arg9[%c0_29, %c0_30, %c0_31], %49 {strides = array<i32>} : memref<1x128x128xf32, #tpu.memory_space<vmem>>, vector<1x128x128xf32>,
    return
  }
  func.func @transform_0(%arg0: i32) -> (i32, i32, i32) {
    %c0_i32 = arith.constant 0 : i32
    %c0_i32_0 = arith.constant 0 : i32
    %c0_i32_1 = arith.constant 0 : i32
    return %arg0, %c0_i32, %c0_i32_0 : i32, i32, i32
  }
  func.func @transform_1(%arg0: i32) -> (i32, i32, i32) {
    %c0_i32 = arith.constant 0 : i32
    %c0_i32_0 = arith.constant 0 : i32
    %c0_i32_1 = arith.constant 0 : i32
    return %arg0, %c0_i32, %c0_i32_0 : i32, i32, i32
  }
  func.func @transform_2(%arg0: i32) -> (i32, i32) {
    %c0_i32 = arith.constant 0 : i32
    %c0_i32_0 = arith.constant 0 : i32
    %c0_i32_1 = arith.constant 0 : i32
    return %c0_i32, %c0_i32_0 : i32, i32
  }
  func.func @transform_3(%arg0: i32) -> (i32, i32) {
    %c0_i32 = arith.constant 0 : i32
    %c0_i32_0 = arith.constant 0 : i32
    %c0_i32_1 = arith.constant 0 : i32
    return %c0_i32, %c0_i32_0 : i32, i32
  }
  func.func @transform_4(%arg0: i32) -> (i32, i32) {
    %c0_i32 = arith.constant 0 : i32
    %c0_i32_0 = arith.constant 0 : i32
    %c0_i32_1 = arith.constant 0 : i32
    return %c0_i32, %c0_i32_0 : i32, i32
  }
  func.func @transform_5(%arg0: i32) -> (i32, i32) {
    %c0_i32 = arith.constant 0 : i32
    %c0_i32_0 = arith.constant 0 : i32
    %c0_i32_1 = arith.constant 0 : i32
    return %c0_i32, %c0_i32_0 : i32, i32
  }
  func.func @transform_6(%arg0: i32) -> (i32, i32) {
    %c0_i32 = arith.constant 0 : i32
    %c0_i32_0 = arith.constant 0 : i32
    %c0_i32_1 = arith.constant 0 : i32
    return %c0_i32, %c0_i32_0 : i32, i32
  }
  func.func @transform_7(%arg0: i32) -> (i32, i32) {
    %c0_i32 = arith.constant 0 : i32
    %c0_i32_0 = arith.constant 0 : i32
    %c0_i32_1 = arith.constant 0 : i32
    return %c0_i32, %c0_i32_0 : i32, i32
  }
  func.func @transform_8(%arg0: i32) -> (i32, i32, i32) {
    %c0_i32 = arith.constant 0 : i32
    %c0_i32_0 = arith.constant 0 : i32
    %c0_i32_1 = arith.constant 0 : i32
    return %arg0, %c0_i32, %c0_i32_0 : i32, i32, i32
  }
}

</mosaic_0001>

<llo_original>
// kernel: tpu_custom_call.1
$region0: #{tpu_custom_call.1}
  #allocation0 [shape = 'u32[]', space=smem, size = 0x4, offset = 0x4, fixed_abs, tag = 'smem constant byte address 0x4 - core index']
  #allocation1 [shape = 'u32[72,128]{1,0:T(1,128)}', space=vmem, size = 0x9000, scoped, tag = 'internal scratch']
  %s0 = inlined_call_operand.hbm [shape: bf16[2,128,128], index: 0, kind: input, shape index: {}]
  %s1 = inlined_call_operand.hbm [shape: bf16[2,128,128], index: 1, kind: input, shape index: {}]
  %s2 = inlined_call_operand.hbm [shape: bf16[128,128], index: 2, kind: input, shape index: {}]
  %s3 = inlined_call_operand.hbm [shape: bf16[128,128], index: 3, kind: input, shape index: {}]
  %s4 = inlined_call_operand.hbm [shape: bf16[128,128], index: 4, kind: input, shape index: {}]
  %s5 = inlined_call_operand.hbm [shape: bf16[128,128], index: 5, kind: input, shape index: {}]
  %s6 = inlined_call_operand.hbm [shape: f32[8,128], index: 6, kind: input, shape index: {}]
  %s7 = inlined_call_operand.vmem [shape: f32[1,128], index: 7, kind: input, shape index: {}]
  %s8 = inlined_call_operand.hbm [shape: f32[2,128,128], index: 8, kind: output, shape index: {}]
  %s9 = sld [smem:[#allocation0]]
  $region93: #{tpu_custom_call.1} parent=0
    _
  %s11 = ssub.s32 1, %s9
  %s12 = scalar_select 0, %s11, %s9
  $region1: #{tpu_custom_call.1} parent=0
    #allocation2 [shape = 'u8[65536]{0}', space=vmem, size = 0x10000, scoped, tag = 'input window, operand 0']
    #allocation3 [shape = 's32[2]{0}', space=sflag, size = 0x8, scoped, tag = 'scoped memory for tpu_custom_call.1']
    #allocation4 [shape = 's32[2]{0}', space=sflag, size = 0x8, scoped, tag = 'scoped memory for tpu_custom_call.1']
    #allocation5 [shape = 'u8[65536]{0}', space=vmem, size = 0x10000, scoped, tag = 'input window, operand 1']
    #allocation6 [shape = 's32[2]{0}', space=sflag, size = 0x8, scoped, tag = 'scoped memory for tpu_custom_call.1']
    #allocation7 [shape = 'u8[32768]{0}', space=vmem, size = 0x8000, scoped, tag = 'input window, operand 2, single buffered']
    #allocation8 [shape = 'u8[32768]{0}', space=vmem, size = 0x8000, scoped, tag = 'input window, operand 3, single buffered']
    #allocation9 [shape = 's32[1]{0}', space=sflag, size = 0x4, scoped, tag = 'scoped memory for tpu_custom_call.1']
    #allocation10 [shape = 'u8[32768]{0}', space=vmem, size = 0x8000, scoped, tag = 'input window, operand 4, single buffered']
    #allocation11 [shape = 'u8[32768]{0}', space=vmem, size = 0x8000, scoped, tag = 'input window, operand 5, single buffered']
    #allocation12 [shape = 's32[1]{0}', space=sflag, size = 0x4, scoped, tag = 'scoped memory for tpu_custom_call.1']
    #allocation13 [shape = 'u8[4096]{0}', space=vmem, size = 0x1000, scoped, tag = 'input window, operand 6, single buffered']
    #allocation14 [shape = 'u8[131072]{0}', space=vmem, size = 0x20000, scoped, tag = 'output window, operand 0']
    %13 = vsyncpa [#allocation3], 0
    %s14 = scalar_lea.sflag [#allocation3], 1
    %15 = vsyncpa %s14, 0
    %16 = vsyncpa [#allocation6], 0
    %s17 = scalar_lea.sflag [#allocation6], 1
    %18 = vsyncpa %s17, 0
    %19 = vsyncpa [#allocation9], 0
    %20 = vsyncpa [#allocation12], 0
    %21 = vsyncpa [#allocation4], 0
    %s22 = scalar_lea.sflag [#allocation4], 1
    %23 = vsyncpa %s22, 0
    loop: start=0, step=1, limit=4
    $region2: #{tpu_custom_call.1} parent=1 // loop_pre_header
      _
    $region3: #{tpu_custom_call.1} parent=1 // loop_header
      %s25 = sphi 0, %s29
      %p26 = scmp.ge.s32.totalorder %s25, 4
      %s35 = sphi 0, %s37
      %s38 = sphi 0, %s35
      %s39 = sphi 0, %s38
      %s55 = sphi 0, %s39
      %s61 = sphi 0, %s63
      %s64 = sphi 0, %s61
      %s65 = sphi 0, %s64
      %s81 = sphi 0, %s65
      %s85 = sphi 0, %s85
      %s87 = sphi 0, %s85
      %s88 = sphi 0, %s87
      %s102 = sphi 0, %s88
      %s106 = sphi 0, %s106
      %s108 = sphi 0, %s106
      %s109 = sphi 0, %s108
      %s123 = sphi 0, %s109
      %s127 = sphi 0, %s127
      %s129 = sphi 0, %s127
      %s130 = sphi 0, %s129
      %s144 = sphi 0, %s130
      %s148 = sphi 0, %s148
      %s150 = sphi 0, %s148
      %s151 = sphi 0, %s150
      %s165 = sphi 0, %s151
      %s169 = sphi 0, %s169
      %s171 = sphi 0, %s169
      %s172 = sphi 0, %s171
      %s186 = sphi 0, %s172
      %s190 = sphi 0, %s190
      %s192 = sphi 0, %s190
      %s193 = sphi 0, %s192
      %s207 = sphi 0, %s193
      %s213 = sphi 0, %s215
      %s216 = sphi 0, %s213
      %s217 = sphi 0, %s216
      %s233 = sphi 0, %s217
    $region4: #{tpu_custom_call.1} parent=1 // loop_header_branch
      %28 = sbr.rel (%p26) target = $region8
    $region5: #{tpu_custom_call.1} parent=1 // loop_body
      %s30 = ssub.s32 %s25, 1
      %s31 = ssub.s32 %s25, 2
      %s32 = sadd.s32 %s25, 1
      %s33 = ssub.s32 %s25, %s32
      %p34 = scmp.eq.s32.totalorder %s33, 0
      %s36 = sadd.s32 %s35, 1
      %s37 = scalar_select %p34, %s35, %s36
      %p40 = pneg %p34
      %p41 = scmp.eq.s32.totalorder %s25, 1
      %p42 = por %p40, %p41
      %p43 = scmp.ne.s32.totalorder %s35, %s38
      %p44 = scmp.eq.s32.totalorder %s25, 0
      %p45 = por %p43, %p44
      %p46 = scmp.ne.s32.totalorder %s35, %s38
      %p47 = scmp.eq.s32.totalorder %s30, 1
      %p48 = por %p46, %p47
      %p49 = scmp.ne.s32.totalorder %s38, %s39
      %p50 = scmp.eq.s32.totalorder %s30, 0
      %p51 = por %p49, %p50
      %p52 = scmp.ne.s32.totalorder %s38, %s39
      %p53 = scmp.eq.s32.totalorder %s31, 1
      %p54 = por %p52, %p53
      %p56 = scmp.ne.s32.totalorder %s39, %s55
      %p57 = scmp.eq.s32.totalorder %s31, 0
      %p58 = por %p56, %p57
      %s59 = ssub.s32 %s25, %s32
      %p60 = scmp.eq.s32.totalorder %s59, 0
      %s62 = sadd.s32 %s61, 1
      %s63 = scalar_select %p60, %s61, %s62
      %p66 = pneg %p60
      %p67 = scmp.eq.s32.totalorder %s25, 1
      %p68 = por %p66, %p67
      %p69 = scmp.ne.s32.totalorder %s61, %s64
      %p70 = scmp.eq.s32.totalorder %s25, 0
      %p71 = por %p69, %p70
      %p72 = scmp.ne.s32.totalorder %s61, %s64
      %p73 = scmp.eq.s32.totalorder %s30, 1
      %p74 = por %p72, %p73
      %p75 = scmp.ne.s32.totalorder %s64, %s65
      %p76 = scmp.eq.s32.totalorder %s30, 0
      %p77 = por %p75, %p76
      %p78 = scmp.ne.s32.totalorder %s64, %s65
      %p79 = scmp.eq.s32.totalorder %s31, 1
      %p80 = por %p78, %p79
      %p82 = scmp.ne.s32.totalorder %s65, %s81
      %p83 = scmp.eq.s32.totalorder %s31, 0
      %p84 = por %p82, %p83
      %s86 = sadd.s32 %s85, 1
      %p89 = scmp.eq.s32.totalorder %s25, 1
      %p90 = scmp.ne.s32.totalorder %s85, %s87
      %p91 = scmp.eq.s32.totalorder %s25, 0
      %p92 = por %p90, %p91
      %p93 = scmp.ne.s32.totalorder %s85, %s87
      %p94 = scmp.eq.s32.totalorder %s30, 1
      %p95 = por %p93, %p94
      %p96 = scmp.ne.s32.totalorder %s87, %s88
      %p97 = scmp.eq.s32.totalorder %s30, 0
      %p98 = por %p96, %p97
      %p99 = scmp.ne.s32.totalorder %s87, %s88
      %p100 = scmp.eq.s32.totalorder %s31, 1
      %p101 = por %p99, %p100
      %p103 = scmp.ne.s32.totalorder %s88, %s102
      %p104 = scmp.eq.s32.totalorder %s31, 0
      %p105 = por %p103, %p104
      %s107 = sadd.s32 %s106, 1
      %p110 = scmp.eq.s32.totalorder %s25, 1
      %p111 = scmp.ne.s32.totalorder %s106, %s108
      %p112 = scmp.eq.s32.totalorder %s25, 0
      %p113 = por %p111, %p112
      %p114 = scmp.ne.s32.totalorder %s106, %s108
      %p115 = scmp.eq.s32.totalorder %s30, 1
      %p116 = por %p114, %p115
      %p117 = scmp.ne.s32.totalorder %s108, %s109
      %p118 = scmp.eq.s32.totalorder %s30, 0
      %p119 = por %p117, %p118
      %p120 = scmp.ne.s32.totalorder %s108, %s109
      %p121 = scmp.eq.s32.totalorder %s31, 1
      %p122 = por %p120, %p121
      %p124 = scmp.ne.s32.totalorder %s109, %s123
      %p125 = scmp.eq.s32.totalorder %s31, 0
      %p126 = por %p124, %p125
      %s128 = sadd.s32 %s127, 1
      %p131 = scmp.eq.s32.totalorder %s25, 1
      %p132 = scmp.ne.s32.totalorder %s127, %s129
      %p133 = scmp.eq.s32.totalorder %s25, 0
      %p134 = por %p132, %p133
      %p135 = scmp.ne.s32.totalorder %s127, %s129
      %p136 = scmp.eq.s32.totalorder %s30, 1
      %p137 = por %p135, %p136
      %p138 = scmp.ne.s32.totalorder %s129, %s130
      %p139 = scmp.eq.s32.totalorder %s30, 0
      %p140 = por %p138, %p139
      %p141 = scmp.ne.s32.totalorder %s129, %s130
      %p142 = scmp.eq.s32.totalorder %s31, 1
      %p143 = por %p141, %p142
      %p145 = scmp.ne.s32.totalorder %s130, %s144
      %p146 = scmp.eq.s32.totalorder %s31, 0
      %p147 = por %p145, %p146
      %s149 = sadd.s32 %s148, 1
      %p152 = scmp.eq.s32.totalorder %s25, 1
      %p153 = scmp.ne.s32.totalorder %s148, %s150
      %p154 = scmp.eq.s32.totalorder %s25, 0
      %p155 = por %p153, %p154
      %p156 = scmp.ne.s32.totalorder %s148, %s150
      %p157 = scmp.eq.s32.totalorder %s30, 1
      %p158 = por %p156, %p157
      %p159 = scmp.ne.s32.totalorder %s150, %s151
      %p160 = scmp.eq.s32.totalorder %s30, 0
      %p161 = por %p159, %p160
      %p162 = scmp.ne.s32.totalorder %s150, %s151
      %p163 = scmp.eq.s32.totalorder %s31, 1
      %p164 = por %p162, %p163
      %p166 = scmp.ne.s32.totalorder %s151, %s165
      %p167 = scmp.eq.s32.totalorder %s31, 0
      %p168 = por %p166, %p167
      %s170 = sadd.s32 %s169, 1
      %p173 = scmp.eq.s32.totalorder %s25, 1
      %p174 = scmp.ne.s32.totalorder %s169, %s171
      %p175 = scmp.eq.s32.totalorder %s25, 0
      %p176 = por %p174, %p175
      %p177 = scmp.ne.s32.totalorder %s169, %s171
      %p178 = scmp.eq.s32.totalorder %s30, 1
      %p179 = por %p177, %p178
      %p180 = scmp.ne.s32.totalorder %s171, %s172
      %p181 = scmp.eq.s32.totalorder %s30, 0
      %p182 = por %p180, %p181
      %p183 = scmp.ne.s32.totalorder %s171, %s172
      %p184 = scmp.eq.s32.totalorder %s31, 1
      %p185 = por %p183, %p184
      %p187 = scmp.ne.s32.totalorder %s172, %s186
      %p188 = scmp.eq.s32.totalorder %s31, 0
      %p189 = por %p187, %p188
      %s191 = sadd.s32 %s190, 1
      %p194 = scmp.eq.s32.totalorder %s25, 1
      %p195 = scmp.ne.s32.totalorder %s190, %s192
      %p196 = scmp.eq.s32.totalorder %s25, 0
      %p197 = por %p195, %p196
      %p198 = scmp.ne.s32.totalorder %s190, %s192
      %p199 = scmp.eq.s32.totalorder %s30, 1
      %p200 = por %p198, %p199
      %p201 = scmp.ne.s32.totalorder %s192, %s193
      %p202 = scmp.eq.s32.totalorder %s30, 0
      %p203 = por %p201, %p202
      %p204 = scmp.ne.s32.totalorder %s192, %s193
      %p205 = scmp.eq.s32.totalorder %s31, 1
      %p206 = por %p204, %p205
      %p208 = scmp.ne.s32.totalorder %s193, %s207
      %p209 = scmp.eq.s32.totalorder %s31, 0
      %p210 = por %p208, %p209
      %s211 = ssub.s32 %s25, %s32
      %p212 = scmp.eq.s32.totalorder %s211, 0
      %s214 = sadd.s32 %s213, 1
      %s215 = scalar_select %p212, %s213, %s214
      %p218 = pneg %p212
      %p219 = scmp.eq.s32.totalorder %s25, 1
      %p220 = por %p218, %p219
      %p221 = scmp.ne.s32.totalorder %s213, %s216
      %p222 = scmp.eq.s32.totalorder %s25, 0
      %p223 = por %p221, %p222
      %p224 = scmp.ne.s32.totalorder %s213, %s216
      %p225 = scmp.eq.s32.totalorder %s30, 1
      %p226 = por %p224, %p225
      %p227 = scmp.ne.s32.totalorder %s216, %s217
      %p228 = scmp.eq.s32.totalorder %s30, 0
      %p229 = por %p227, %p228
      %p230 = scmp.ne.s32.totalorder %s216, %s217
      %p231 = scmp.eq.s32.totalorder %s31, 1
      %p232 = por %p230, %p231
      %p234 = scmp.ne.s32.totalorder %s217, %s233
      %p235 = scmp.eq.s32.totalorder %s31, 0
      %p236 = por %p234, %p235
      %p237 = scmp.le.s32.totalorder 1, %s25
      %p238 = scmp.lt.s32.totalorder %s25, 3
      %p239 = pnand %p237, %p238
      %p240 = pneg %p239
      // Predicated region
      $region9: #{tpu_custom_call.1} parent=5 // pred_check
        _
      $region10: #{tpu_custom_call.1} parent=5 // pred_check_branch
        %242 = sbr.rel (%p239) target = $region12
      $region11: #{tpu_custom_call.1} parent=5 // pred_region
        %s243 = ssub.s32 %s25, 1
        // Predicated region
        $region13: #{tpu_custom_call.1} parent=11 // pred_check
          %p244 = pneg %p98
        $region14: #{tpu_custom_call.1} parent=11 // pred_check_branch
          %246 = sbr.rel (%p244) target = $region16
        $region15: #{tpu_custom_call.1} parent=11 // pred_region
          %248 = vsyncadd [#allocation6], 0
          %s249 = sshll.u32 %s2, 4
          %s250 = int_to_ptr.hbm [resolvable:$true] %s249
          %s251 = sshll.u32 [#allocation7], 4
          %s252 = int_to_ptr.vmem [resolvable:$true] %s251
          %257 = dma.hbm_to_vmem [thread:$0]  %s250, 1024, %s252, [#allocation6], 64, 64, 4
        $region16: #{tpu_custom_call.1} parent=11 // pred_fallthru
          _
        // Predicated region
        $region17: #{tpu_custom_call.1} parent=11 // pred_check
          %p258 = pneg %p119
        $region18: #{tpu_custom_call.1} parent=11 // pred_check_branch
          %260 = sbr.rel (%p258) target = $region20
        $region19: #{tpu_custom_call.1} parent=11 // pred_region
          %262 = vsyncadd [#allocation9], 0
          %s263 = sshll.u32 %s3, 4
          %s264 = int_to_ptr.hbm [resolvable:$true] %s263
          %s265 = sshll.u32 [#allocation8], 4
          %s266 = int_to_ptr.vmem [resolvable:$true] %s265
          %271 = dma.hbm_to_vmem [thread:$0]  %s264, 1024, %s266, [#allocation9], 64, 64, 4
        $region20: #{tpu_custom_call.1} parent=11 // pred_fallthru
          _
        // Predicated region
        $region21: #{tpu_custom_call.1} parent=11 // pred_check
          %p272 = pneg %p140
        $region22: #{tpu_custom_call.1} parent=11 // pred_check_branch
          %274 = sbr.rel (%p272) target = $region24
        $region23: #{tpu_custom_call.1} parent=11 // pred_region
          %276 = vsyncadd [#allocation9], 0
          %s277 = sshll.u32 %s4, 4
          %s278 = int_to_ptr.hbm [resolvable:$true] %s277
          %s279 = sshll.u32 [#allocation10], 4
          %s280 = int_to_ptr.vmem [resolvable:$true] %s279
          %285 = dma.hbm_to_vmem [thread:$0]  %s278, 1024, %s280, [#allocation9], 64, 64, 4
        $region24: #{tpu_custom_call.1} parent=11 // pred_fallthru
          _
        // Predicated region
        $region25: #{tpu_custom_call.1} parent=11 // pred_check
          %p286 = pneg %p161
        $region26: #{tpu_custom_call.1} parent=11 // pred_check_branch
          %288 = sbr.rel (%p286) target = $region28
        $region27: #{tpu_custom_call.1} parent=11 // pred_region
          %290 = vsyncadd [#allocation12], 0
          %s291 = sshll.u32 %s5, 4
          %s292 = int_to_ptr.hbm [resolvable:$true] %s291
          %s293 = sshll.u32 [#allocation11], 4
          %s294 = int_to_ptr.vmem [resolvable:$true] %s293
          %299 = dma.hbm_to_vmem [thread:$0]  %s292, 1024, %s294, [#allocation12], 64, 64, 4
        $region28: #{tpu_custom_call.1} parent=11 // pred_fallthru
          _
        // Predicated region
        $region29: #{tpu_custom_call.1} parent=11 // pred_check
          %p300 = pneg %p182
        $region30: #{tpu_custom_call.1} parent=11 // pred_check_branch
          %302 = sbr.rel (%p300) target = $region32
        $region31: #{tpu_custom_call.1} parent=11 // pred_region
          %304 = vsyncadd [#allocation12], 0
          %s306 = sshll.u32 %s6, 4
          %s307 = int_to_ptr.hbm [resolvable:$true] %s306
          %s308 = sshll.u32 [#allocation13], 4
          %s309 = int_to_ptr.vmem [resolvable:$true] %s308
          %311 = dma.hbm_to_vmem [thread:$0]  %s307, 128, %s309, [#allocation12]
        $region32: #{tpu_custom_call.1} parent=11 // pred_fallthru
          _
        // Predicated region
        $region33: #{tpu_custom_call.1} parent=11 // pred_check
          %p312 = pneg %p203
        $region34: #{tpu_custom_call.1} parent=11 // pred_check_branch
          %314 = sbr.rel (%p312) target = $region36
        $region35: #{tpu_custom_call.1} parent=11 // pred_region
          _
        $region36: #{tpu_custom_call.1} parent=11 // pred_fallthru
          _
      $region12: #{tpu_custom_call.1} parent=5 // pred_fallthru
        _
      %p315 = scmp.lt.s32.totalorder %s25, 2
      // Predicated region
      $region37: #{tpu_custom_call.1} parent=5 // pred_check
        %p316 = pneg %p315
      $region38: #{tpu_custom_call.1} parent=5 // pred_check_branch
        %318 = sbr.rel (%p316) target = $region40
      $region39: #{tpu_custom_call.1} parent=5 // pred_region
        // Predicated region
        $region41: #{tpu_custom_call.1} parent=39 // pred_check
          %p319 = pneg %p45
        $region42: #{tpu_custom_call.1} parent=39 // pred_check_branch
          %321 = sbr.rel (%p319) target = $region44
        $region43: #{tpu_custom_call.1} parent=39 // pred_region
          %s322 = sand.u32 %s35, 1
          %s323 = scalar_lea.sflag [#allocation3], %s322
          %s324 = sand.u32 %s35, 1
          %s325 = smul.addr %s324, 64
          %s326 = scalar_lea.vmem [#allocation2], %s325
          %328 = vsyncadd %s323, 0
          %s329 = smul.addr %s25, 16
          %s330 = smul.addr %s329, 4
          %s331 = scalar_lea.hbm %s0, %s330
          %s332 = sshll.u32 %s331, 4
          %s333 = int_to_ptr.hbm [resolvable:$true] %s332
          %s334 = sshll.u32 %s326, 4
          %s335 = int_to_ptr.vmem [resolvable:$true] %s334
          %340 = dma.hbm_to_vmem [thread:$0]  %s333, 1024, %s335, %s323, 64, 64, 4
        $region44: #{tpu_custom_call.1} parent=39 // pred_fallthru
          _
        // Predicated region
        $region45: #{tpu_custom_call.1} parent=39 // pred_check
          %p341 = pneg %p71
        $region46: #{tpu_custom_call.1} parent=39 // pred_check_branch
          %343 = sbr.rel (%p341) target = $region48
        $region47: #{tpu_custom_call.1} parent=39 // pred_region
          %s344 = sand.u32 %s25, 1
          %s345 = scalar_lea.sflag [#allocation6], %s344
          %s346 = sand.u32 %s61, 1
          %s347 = smul.addr %s346, 64
          %s348 = scalar_lea.vmem [#allocation5], %s347
          %350 = vsyncadd %s345, 0
          %s351 = smul.addr %s25, 16
          %s352 = smul.addr %s351, 4
          %s353 = scalar_lea.hbm %s1, %s352
          %s354 = sshll.u32 %s353, 4
          %s355 = int_to_ptr.hbm [resolvable:$true] %s354
          %s356 = sshll.u32 %s348, 4
          %s357 = int_to_ptr.vmem [resolvable:$true] %s356
          %362 = dma.hbm_to_vmem [thread:$0]  %s355, 1024, %s357, %s345, 64, 64, 4
        $region48: #{tpu_custom_call.1} parent=39 // pred_fallthru
          _
      $region40: #{tpu_custom_call.1} parent=5 // pred_fallthru
        _
      %p363 = scmp.le.s32.totalorder 1, %s25
      %p364 = scmp.lt.s32.totalorder %s25, 3
      %p365 = pnand %p363, %p364
      %p366 = pneg %p365
      // Predicated region
      $region49: #{tpu_custom_call.1} parent=5 // pred_check
        _
      $region50: #{tpu_custom_call.1} parent=5 // pred_check_branch
        %368 = sbr.rel (%p365) target = $region52
      $region51: #{tpu_custom_call.1} parent=5 // pred_region
        %s369 = ssub.s32 %s25, 1
        %s370 = sand.u32 %s38, 1
        %s371 = scalar_lea.sflag [#allocation3], %s370
        %s372 = sand.u32 %s38, 1
        %s373 = smul.addr %s372, 64
        %s374 = scalar_lea.vmem [#allocation2], %s373
        // Predicated region
        $region53: #{tpu_custom_call.1} parent=51 // pred_check
          %p375 = pneg %p51
        $region54: #{tpu_custom_call.1} parent=51 // pred_check_branch
          %377 = sbr.rel (%p375) target = $region56
        $region55: #{tpu_custom_call.1} parent=51 // pred_region
          %379 = dma.done %s371, 1024
        $region56: #{tpu_custom_call.1} parent=51 // pred_fallthru
          _
        %s380 = sand.u32 %s30, 1
        %s381 = scalar_lea.sflag [#allocation6], %s380
        %s382 = sand.u32 %s64, 1
        %s383 = smul.addr %s382, 64
        %s384 = scalar_lea.vmem [#allocation5], %s383
        // Predicated region
        $region57: #{tpu_custom_call.1} parent=51 // pred_check
          %p385 = pneg %p77
        $region58: #{tpu_custom_call.1} parent=51 // pred_check_branch
          %387 = sbr.rel (%p385) target = $region60
        $region59: #{tpu_custom_call.1} parent=51 // pred_region
          %389 = dma.done %s381, 1024
        $region60: #{tpu_custom_call.1} parent=51 // pred_fallthru
          _
        // Predicated region
        $region61: #{tpu_custom_call.1} parent=51 // pred_check
          %p390 = pneg %p98
        $region62: #{tpu_custom_call.1} parent=51 // pred_check_branch
          %392 = sbr.rel (%p390) target = $region64
        $region63: #{tpu_custom_call.1} parent=51 // pred_region
          %394 = dma.done [#allocation6], 1024
        $region64: #{tpu_custom_call.1} parent=51 // pred_fallthru
          _
        // Predicated region
        $region65: #{tpu_custom_call.1} parent=51 // pred_check
          %p395 = pneg %p119
        $region66: #{tpu_custom_call.1} parent=51 // pred_check_branch
          %397 = sbr.rel (%p395) target = $region68
        $region67: #{tpu_custom_call.1} parent=51 // pred_region
          %399 = dma.done [#allocation9], 1024
        $region68: #{tpu_custom_call.1} parent=51 // pred_fallthru
          _
        // Predicated region
        $region69: #{tpu_custom_call.1} parent=51 // pred_check
          %p400 = pneg %p140
        $region70: #{tpu_custom_call.1} parent=51 // pred_check_branch
          %402 = sbr.rel (%p400) target = $region72
        $region71: #{tpu_custom_call.1} parent=51 // pred_region
          %404 = dma.done [#allocation9], 1024
        $region72: #{tpu_custom_call.1} parent=51 // pred_fallthru
          _
        // Predicated region
        $region73: #{tpu_custom_call.1} parent=51 // pred_check
          %p405 = pneg %p161
        $region74: #{tpu_custom_call.1} parent=51 // pred_check_branch
          %407 = sbr.rel (%p405) target = $region76
        $region75: #{tpu_custom_call.1} parent=51 // pred_region
          %409 = dma.done [#allocation12], 1024
        $region76: #{tpu_custom_call.1} parent=51 // pred_fallthru
          _
        // Predicated region
        $region77: #{tpu_custom_call.1} parent=51 // pred_check
          %p410 = pneg %p182
        $region78: #{tpu_custom_call.1} parent=51 // pred_check_branch
          %412 = sbr.rel (%p410) target = $region80
        $region79: #{tpu_custom_call.1} parent=51 // pred_region
          %414 = dma.done [#allocation12], 128
        $region80: #{tpu_custom_call.1} parent=51 // pred_fallthru
          _
        %s415 = sand.u32 %s38, 1
        %s416 = scalar_lea.sflag [#allocation3], %s415
        %s417 = sand.u32 %s38, 1
        %s418 = smul.addr %s417, 64
        %s419 = scalar_lea.vmem [#allocation2], %s418
        %p420 = pneg %p51
        %p421 = pneg %p48
        %s422 = sand.u32 %s30, 1
        %s423 = scalar_lea.sflag [#allocation6], %s422
        %s424 = sand.u32 %s64, 1
        %s425 = smul.addr %s424, 64
        %s426 = scalar_lea.vmem [#allocation5], %s425
        %p427 = pneg %p77
        %p428 = pneg %p74
        %p429 = pneg %p98
        %p430 = pneg %p95
        %p431 = pneg %p119
        %p432 = pneg %p116
        %p433 = pneg %p140
        %p434 = pneg %p137
        %p435 = pneg %p161
        %p436 = pneg %p158
        %p437 = pneg %p182
        %p438 = pneg %p179
        %p439 = pneg %p203
        %p440 = pneg %p200
        %p441 = pneg %p229
        %p442 = pneg %p226
        %s443 = sand.u32 %s216, 1
        %s444 = scalar_lea.sflag [#allocation4], %s443
        %s445 = sand.u32 %s216, 1
        %s446 = smul.addr %s445, 128
        %s447 = scalar_lea.vmem [#allocation14], %s446
        %v448 = vld [vmem:[%s374] sm:$0xf]
        %v449 = vld [vmem:[%s374 + $0x4] sm:$0xf]
        %v450 = vld [vmem:[%s374 + $0x8] sm:$0xf]
        %v451 = vld [vmem:[%s374 + $0xc] sm:$0xf]
        %v452 = vld [vmem:[%s374 + $0x10] sm:$0xf]
        %v453 = vld [vmem:[%s374 + $0x14] sm:$0xf]
        %v454 = vld [vmem:[%s374 + $0x18] sm:$0xf]
        %v455 = vld [vmem:[%s374 + $0x1c] sm:$0xf]
        %v456 = vld [vmem:[%s374 + $0x20] sm:$0xf]
        %v457 = vld [vmem:[%s374 + $0x24] sm:$0xf]
        %v458 = vld [vmem:[%s374 + $0x28] sm:$0xf]
        %v459 = vld [vmem:[%s374 + $0x2c] sm:$0xf]
        %v460 = vld [vmem:[%s374 + $0x30] sm:$0xf]
        %v461 = vld [vmem:[%s374 + $0x34] sm:$0xf]
        %v462 = vld [vmem:[%s374 + $0x38] sm:$0xf]
        %v463 = vld [vmem:[%s374 + $0x3c] sm:$0xf]
        %v464 = vld [vmem:[%s384] sm:$0xf]
        %v465 = vld [vmem:[%s384 + $0x4] sm:$0xf]
        %v466 = vld [vmem:[%s384 + $0x8] sm:$0xf]
        %v467 = vld [vmem:[%s384 + $0xc] sm:$0xf]
        %v468 = vld [vmem:[%s384 + $0x10] sm:$0xf]
        %v469 = vld [vmem:[%s384 + $0x14] sm:$0xf]
        %v470 = vld [vmem:[%s384 + $0x18] sm:$0xf]
        %v471 = vld [vmem:[%s384 + $0x1c] sm:$0xf]
        %v472 = vld [vmem:[%s384 + $0x20] sm:$0xf]
        %v473 = vld [vmem:[%s384 + $0x24] sm:$0xf]
        %v474 = vld [vmem:[%s384 + $0x28] sm:$0xf]
        %v475 = vld [vmem:[%s384 + $0x2c] sm:$0xf]
        %v476 = vld [vmem:[%s384 + $0x30] sm:$0xf]
        %v477 = vld [vmem:[%s384 + $0x34] sm:$0xf]
        %v478 = vld [vmem:[%s384 + $0x38] sm:$0xf]
        %v479 = vld [vmem:[%s384 + $0x3c] sm:$0xf]
        %v480 = vld [vmem:[#allocation13] sm:$0x1]
        %v481 = vld [vmem:[#allocation13 + $0x1] sm:$0x1]
        %v482 = vld [vmem:[#allocation13 + $0x2] sm:$0x1]
        %v483 = vld [vmem:[#allocation7] sm:$0xf]
        %v484 = vld [vmem:[#allocation7 + $0x4] sm:$0xf]
        %v485 = vld [vmem:[#allocation7 + $0x8] sm:$0xf]
        %v486 = vld [vmem:[#allocation7 + $0xc] sm:$0xf]
        %v487 = vld [vmem:[#allocation7 + $0x10] sm:$0xf]
        %v488 = vld [vmem:[#allocation7 + $0x14] sm:$0xf]
        %v489 = vld [vmem:[#allocation7 + $0x18] sm:$0xf]
        %v490 = vld [vmem:[#allocation7 + $0x1c] sm:$0xf]
        %v491 = vld [vmem:[#allocation7 + $0x20] sm:$0xf]
        %v492 = vld [vmem:[#allocation7 + $0x24] sm:$0xf]
        %v493 = vld [vmem:[#allocation7 + $0x28] sm:$0xf]
        %v494 = vld [vmem:[#allocation7 + $0x2c] sm:$0xf]
        %v495 = vld [vmem:[#allocation7 + $0x30] sm:$0xf]
        %v496 = vld [vmem:[#allocation7 + $0x34] sm:$0xf]
        %v497 = vld [vmem:[#allocation7 + $0x38] sm:$0xf]
        %v498 = vld [vmem:[#allocation7 + $0x3c] sm:$0xf]
        %v499 = vperm.slane %v480, 0
        %v516 = vunpack.c.l.b16 %v448
        %v517 = vunpack.c.l.b16 %v449
        %v518 = vunpack.c.l.b16 %v450
        %v519 = vunpack.c.l.b16 %v451
        %v520 = vunpack.c.l.b16 %v452
        %v521 = vunpack.c.l.b16 %v453
        %v522 = vunpack.c.l.b16 %v454
        %v523 = vunpack.c.l.b16 %v455
        %v524 = vunpack.c.l.b16 %v456
        %v525 = vunpack.c.l.b16 %v457
        %v526 = vunpack.c.l.b16 %v458
        %v527 = vunpack.c.l.b16 %v459
        %v528 = vunpack.c.l.b16 %v460
        %v529 = vunpack.c.l.b16 %v461
        %v530 = vunpack.c.l.b16 %v462
        %v531 = vunpack.c.l.b16 %v463
        %v532 = vpack.c.b16 %v517, %v516
        %v533 = vpack.c.b16 %v519, %v518
        %v534 = vpack.c.b16 %v521, %v520
        %v535 = vpack.c.b16 %v523, %v522
        %v536 = vpack.c.b16 %v525, %v524
        %v537 = vpack.c.b16 %v527, %v526
        %v538 = vpack.c.b16 %v529, %v528
        %v539 = vpack.c.b16 %v531, %v530
        %v564 = vunpack.c.l.b16 %v483
        %v565 = vunpack.c.l.b16 %v484
        %v566 = vunpack.c.l.b16 %v485
        %v567 = vunpack.c.l.b16 %v486
        %v568 = vunpack.c.l.b16 %v487
        %v569 = vunpack.c.l.b16 %v488
        %v570 = vunpack.c.l.b16 %v489
        %v571 = vunpack.c.l.b16 %v490
        %v572 = vunpack.c.l.b16 %v491
        %v573 = vunpack.c.l.b16 %v492
        %v574 = vunpack.c.l.b16 %v493
        %v575 = vunpack.c.l.b16 %v494
        %v576 = vunpack.c.l.b16 %v495
        %v577 = vunpack.c.l.b16 %v496
        %v578 = vunpack.c.l.b16 %v497
        %v579 = vunpack.c.l.b16 %v498
        %v580 = vpack.c.b16 %v565, %v564
        %v581 = vpack.c.b16 %v567, %v566
        %v582 = vpack.c.b16 %v569, %v568
        %v583 = vpack.c.b16 %v571, %v570
        %v584 = vpack.c.b16 %v573, %v572
        %v585 = vpack.c.b16 %v575, %v574
        %v586 = vpack.c.b16 %v577, %v576
        %v587 = vpack.c.b16 %v579, %v578
        %596 = vmatpush.bf16.msra.mxu0 %v587
        %597 = vmatpush.bf16.msra.mxu0 %v586
        %598 = vmatpush.bf16.msra.mxu0 %v585
        %599 = vmatpush.bf16.msra.mxu0 %v584
        %600 = vmatpush.bf16.msra.mxu0 %v583
        %601 = vmatpush.bf16.msra.mxu0 %v582
        %602 = vmatpush.bf16.msra.mxu0 %v581
        %603 = vmatpush.bf16.msra.mxu0 %v580
        %604 = vmatmul.bf16.gmra.mxu0 %v532
        %v605 = vpop.f32.mrf.mxu0
        %v606 = vadd.f32 %v499, %v605
        %v607 = vpop.f32.mrf.mxu0
        %v608 = vadd.f32 %v499, %v607
        %609 = vmatmul.bf16.gmra.mxu0 %v533
        %v610 = vpop.f32.mrf.mxu0
        %v611 = vadd.f32 %v499, %v610
        %v612 = vpop.f32.mrf.mxu0
        %v613 = vadd.f32 %v499, %v612
        %614 = vmatmul.bf16.gmra.mxu0 %v534
        %v615 = vpop.f32.mrf.mxu0
        %v616 = vadd.f32 %v499, %v615
        %v617 = vpop.f32.mrf.mxu0
        %v618 = vadd.f32 %v499, %v617
        %619 = vmatmul.bf16.gmra.mxu0 %v535
        %v620 = vpop.f32.mrf.mxu0
        %v621 = vadd.f32 %v499, %v620
        %v622 = vpop.f32.mrf.mxu0
        %v623 = vadd.f32 %v499, %v622
        %624 = vmatmul.bf16.gmra.mxu0 %v536
        %v625 = vpop.f32.mrf.mxu0
        %v626 = vadd.f32 %v499, %v625
        %v627 = vpop.f32.mrf.mxu0
        %v628 = vadd.f32 %v499, %v627
        %629 = vmatmul.bf16.gmra.mxu0 %v537
        %v630 = vpop.f32.mrf.mxu0
        %v631 = vadd.f32 %v499, %v630
        %v632 = vpop.f32.mrf.mxu0
        %v633 = vadd.f32 %v499, %v632
        %634 = vmatmul.bf16.gmra.mxu0 %v538
        %v635 = vpop.f32.mrf.mxu0
        %v636 = vadd.f32 %v499, %v635
        %v637 = vpop.f32.mrf.mxu0
        %v638 = vadd.f32 %v499, %v637
        %639 = vmatmul.bf16.gmra.mxu0 %v539
        %v640 = vpop.f32.mrf.mxu0
        %v641 = vadd.f32 %v499, %v640
        %v642 = vpop.f32.mrf.mxu0
        %v643 = vadd.f32 %v499, %v642
        %644 = vdwg.mxu0
        %v645 = vmax.f32 %v606, 0.0
        %v646 = vmax.f32 %v608, 0.0
        %v647 = vmax.f32 %v611, 0.0
        %v648 = vmax.f32 %v613, 0.0
        %v649 = vmax.f32 %v616, 0.0
        %v650 = vmax.f32 %v618, 0.0
        %v651 = vmax.f32 %v621, 0.0
        %v652 = vmax.f32 %v623, 0.0
        %v653 = vmax.f32 %v626, 0.0
        %v654 = vmax.f32 %v628, 0.0
        %v655 = vmax.f32 %v631, 0.0
        %v656 = vmax.f32 %v633, 0.0
        %v657 = vmax.f32 %v636, 0.0
        %v658 = vmax.f32 %v638, 0.0
        %v659 = vmax.f32 %v641, 0.0
        %v660 = vmax.f32 %v643, 0.0
        %v661 = vpack.c.bf16 %v646, %v645
        %v662 = vpack.c.bf16 %v648, %v647
        %v663 = vpack.c.bf16 %v650, %v649
        %v664 = vpack.c.bf16 %v652, %v651
        %v665 = vpack.c.bf16 %v654, %v653
        %v666 = vpack.c.bf16 %v656, %v655
        %v667 = vpack.c.bf16 %v658, %v657
        %v668 = vpack.c.bf16 %v660, %v659
        %v669 = vld [vmem:[#allocation8] sm:$0xf]
        %v670 = vld [vmem:[#allocation8 + $0x4] sm:$0xf]
        %v671 = vld [vmem:[#allocation8 + $0x8] sm:$0xf]
        %v672 = vld [vmem:[#allocation8 + $0xc] sm:$0xf]
        %v673 = vld [vmem:[#allocation8 + $0x10] sm:$0xf]
        %v674 = vld [vmem:[#allocation8 + $0x14] sm:$0xf]
        %v675 = vld [vmem:[#allocation8 + $0x18] sm:$0xf]
        %v676 = vld [vmem:[#allocation8 + $0x1c] sm:$0xf]
        %v677 = vld [vmem:[#allocation8 + $0x20] sm:$0xf]
        %v678 = vld [vmem:[#allocation8 + $0x24] sm:$0xf]
        %v679 = vld [vmem:[#allocation8 + $0x28] sm:$0xf]
        %v680 = vld [vmem:[#allocation8 + $0x2c] sm:$0xf]
        %v681 = vld [vmem:[#allocation8 + $0x30] sm:$0xf]
        %v682 = vld [vmem:[#allocation8 + $0x34] sm:$0xf]
        %v683 = vld [vmem:[#allocation8 + $0x38] sm:$0xf]
        %v684 = vld [vmem:[#allocation8 + $0x3c] sm:$0xf]
        %v701 = vunpack.c.l.b16 %v669
        %v702 = vunpack.c.l.b16 %v670
        %v703 = vunpack.c.l.b16 %v671
        %v704 = vunpack.c.l.b16 %v672
        %v705 = vunpack.c.l.b16 %v673
        %v706 = vunpack.c.l.b16 %v674
        %v707 = vunpack.c.l.b16 %v675
        %v708 = vunpack.c.l.b16 %v676
        %v709 = vunpack.c.l.b16 %v677
        %v710 = vunpack.c.l.b16 %v678
        %v711 = vunpack.c.l.b16 %v679
        %v712 = vunpack.c.l.b16 %v680
        %v713 = vunpack.c.l.b16 %v681
        %v714 = vunpack.c.l.b16 %v682
        %v715 = vunpack.c.l.b16 %v683
        %v716 = vunpack.c.l.b16 %v684
        %v717 = vpack.c.b16 %v702, %v701
        %v718 = vpack.c.b16 %v704, %v703
        %v719 = vpack.c.b16 %v706, %v705
        %v720 = vpack.c.b16 %v708, %v707
        %v721 = vpack.c.b16 %v710, %v709
        %v722 = vpack.c.b16 %v712, %v711
        %v723 = vpack.c.b16 %v714, %v713
        %v724 = vpack.c.b16 %v716, %v715
        %733 = vmatpush.bf16.msra.mxu0 %v724
        %734 = vmatpush.bf16.msra.mxu0 %v723
        %735 = vmatpush.bf16.msra.mxu0 %v722
        %736 = vmatpush.bf16.msra.mxu0 %v721
        %737 = vmatpush.bf16.msra.mxu0 %v720
        %738 = vmatpush.bf16.msra.mxu0 %v719
        %739 = vmatpush.bf16.msra.mxu0 %v718
        %740 = vmatpush.bf16.msra.mxu0 %v717
        %741 = vmatmul.bf16.gmra.mxu0 %v661
        %v742 = vpop.f32.mrf.mxu0
        %v743 = vadd.f32 0.0, %v742
        %v744 = vpop.f32.mrf.mxu0
        %v745 = vadd.f32 0.0, %v744
        %746 = vmatmul.bf16.gmra.mxu0 %v662
        %v747 = vpop.f32.mrf.mxu0
        %v748 = vadd.f32 0.0, %v747
        %v749 = vpop.f32.mrf.mxu0
        %v750 = vadd.f32 0.0, %v749
        %751 = vmatmul.bf16.gmra.mxu0 %v663
        %v752 = vpop.f32.mrf.mxu0
        %v753 = vadd.f32 0.0, %v752
        %v754 = vpop.f32.mrf.mxu0
        %v755 = vadd.f32 0.0, %v754
        %756 = vmatmul.bf16.gmra.mxu0 %v664
        %v757 = vpop.f32.mrf.mxu0
        %v758 = vadd.f32 0.0, %v757
        %v759 = vpop.f32.mrf.mxu0
        %v760 = vadd.f32 0.0, %v759
        %761 = vmatmul.bf16.gmra.mxu0 %v665
        %v762 = vpop.f32.mrf.mxu0
        %v763 = vadd.f32 0.0, %v762
        %v764 = vpop.f32.mrf.mxu0
        %v765 = vadd.f32 0.0, %v764
        %766 = vmatmul.bf16.gmra.mxu0 %v666
        %v767 = vpop.f32.mrf.mxu0
        %v768 = vadd.f32 0.0, %v767
        %v769 = vpop.f32.mrf.mxu0
        %v770 = vadd.f32 0.0, %v769
        %771 = vmatmul.bf16.gmra.mxu0 %v667
        %v772 = vpop.f32.mrf.mxu0
        %v773 = vadd.f32 0.0, %v772
        %v774 = vpop.f32.mrf.mxu0
        %v775 = vadd.f32 0.0, %v774
        %776 = vmatmul.bf16.gmra.mxu0 %v668
        %v777 = vpop.f32.mrf.mxu0
        %v778 = vadd.f32 0.0, %v777
        %v779 = vpop.f32.mrf.mxu0
        %v780 = vadd.f32 0.0, %v779
        %781 = vdwg.mxu0
        %v782 = vpack.c.bf16 %v745, %v743
        %v783 = vpack.c.bf16 %v750, %v748
        %v784 = vpack.c.bf16 %v755, %v753
        %v785 = vpack.c.bf16 %v760, %v758
        %v786 = vpack.c.bf16 %v765, %v763
        %v787 = vpack.c.bf16 %v770, %v768
        %v788 = vpack.c.bf16 %v775, %v773
        %v789 = vpack.c.bf16 %v780, %v778
        %v790 = vperm.slane %v481, 0
        %v807 = vunpack.c.l.b16 %v464
        %v808 = vunpack.c.l.b16 %v465
        %v809 = vunpack.c.l.b16 %v466
        %v810 = vunpack.c.l.b16 %v467
        %v811 = vunpack.c.l.b16 %v468
        %v812 = vunpack.c.l.b16 %v469
        %v813 = vunpack.c.l.b16 %v470
        %v814 = vunpack.c.l.b16 %v471
        %v815 = vunpack.c.l.b16 %v472
        %v816 = vunpack.c.l.b16 %v473
        %v817 = vunpack.c.l.b16 %v474
        %v818 = vunpack.c.l.b16 %v475
        %v819 = vunpack.c.l.b16 %v476
        %v820 = vunpack.c.l.b16 %v477
        %v821 = vunpack.c.l.b16 %v478
        %v822 = vunpack.c.l.b16 %v479
        %v823 = vpack.c.b16 %v808, %v807
        %v824 = vpack.c.b16 %v810, %v809
        %v825 = vpack.c.b16 %v812, %v811
        %v826 = vpack.c.b16 %v814, %v813
        %v827 = vpack.c.b16 %v816, %v815
        %v828 = vpack.c.b16 %v818, %v817
        %v829 = vpack.c.b16 %v820, %v819
        %v830 = vpack.c.b16 %v822, %v821
        %839 = vmatpush.bf16.msra.mxu0 %v789
        %840 = vmatpush.bf16.msra.mxu0 %v788
        %841 = vmatpush.bf16.msra.mxu0 %v787
        %842 = vmatpush.bf16.msra.mxu0 %v786
        %843 = vmatpush.bf16.msra.mxu0 %v785
        %844 = vmatpush.bf16.msra.mxu0 %v784
        %845 = vmatpush.bf16.msra.mxu0 %v783
        %846 = vmatpush.bf16.msra.mxu0 %v782
        %847 = vmatmul.bf16.gmra.mxu0 %v823
        %v848 = vpop.f32.mrf.mxu0
        %v849 = vadd.f32 %v790, %v848
        %v850 = vpop.f32.mrf.mxu0
        %v851 = vadd.f32 %v790, %v850
        %852 = vmatmul.bf16.gmra.mxu0 %v824
        %v853 = vpop.f32.mrf.mxu0
        %v854 = vadd.f32 %v790, %v853
        %v855 = vpop.f32.mrf.mxu0
        %v856 = vadd.f32 %v790, %v855
        %857 = vmatmul.bf16.gmra.mxu0 %v825
        %v858 = vpop.f32.mrf.mxu0
        %v859 = vadd.f32 %v790, %v858
        %v860 = vpop.f32.mrf.mxu0
        %v861 = vadd.f32 %v790, %v860
        %862 = vmatmul.bf16.gmra.mxu0 %v826
        %v863 = vpop.f32.mrf.mxu0
        %v864 = vadd.f32 %v790, %v863
        %v865 = vpop.f32.mrf.mxu0
        %v866 = vadd.f32 %v790, %v865
        %867 = vmatmul.bf16.gmra.mxu0 %v827
        %v868 = vpop.f32.mrf.mxu0
        %v869 = vadd.f32 %v790, %v868
        %v870 = vpop.f32.mrf.mxu0
        %v871 = vadd.f32 %v790, %v870
        %872 = vmatmul.bf16.gmra.mxu0 %v828
        %v873 = vpop.f32.mrf.mxu0
        %v874 = vadd.f32 %v790, %v873
        %v875 = vpop.f32.mrf.mxu0
        %v876 = vadd.f32 %v790, %v875
        %877 = vmatmul.bf16.gmra.mxu0 %v829
        %v878 = vpop.f32.mrf.mxu0
        %v879 = vadd.f32 %v790, %v878
        %v880 = vpop.f32.mrf.mxu0
        %v881 = vadd.f32 %v790, %v880
        %882 = vmatmul.bf16.gmra.mxu0 %v830
        %v883 = vpop.f32.mrf.mxu0
        %v884 = vadd.f32 %v790, %v883
        %v885 = vpop.f32.mrf.mxu0
        %v886 = vadd.f32 %v790, %v885
        %887 = vdwg.mxu0
        %v888 = vmax.f32 %v849, 0.0
        %v889 = vmax.f32 %v851, 0.0
        %v890 = vmax.f32 %v854, 0.0
        %v891 = vmax.f32 %v856, 0.0
        %v892 = vmax.f32 %v859, 0.0
        %v893 = vmax.f32 %v861, 0.0
        %v894 = vmax.f32 %v864, 0.0
        %v895 = vmax.f32 %v866, 0.0
        %v896 = vmax.f32 %v869, 0.0
        %v897 = vmax.f32 %v871, 0.0
        %v898 = vmax.f32 %v874, 0.0
        %v899 = vmax.f32 %v876, 0.0
        %v900 = vmax.f32 %v879, 0.0
        %v901 = vmax.f32 %v881, 0.0
        %v902 = vmax.f32 %v884, 0.0
        %v903 = vmax.f32 %v886, 0.0
        %v904 = vpack.c.bf16 %v889, %v888
        %v905 = vpack.c.bf16 %v891, %v890
        %v906 = vpack.c.bf16 %v893, %v892
        %v907 = vpack.c.bf16 %v895, %v894
        %v908 = vpack.c.bf16 %v897, %v896
        %v909 = vpack.c.bf16 %v899, %v898
        %v910 = vpack.c.bf16 %v901, %v900
        %v911 = vpack.c.bf16 %v903, %v902
        %v912 = vld [vmem:[#allocation10] sm:$0xf]
        %v913 = vld [vmem:[#allocation10 + $0x4] sm:$0xf]
        %v914 = vld [vmem:[#allocation10 + $0x8] sm:$0xf]
        %v915 = vld [vmem:[#allocation10 + $0xc] sm:$0xf]
        %v916 = vld [vmem:[#allocation10 + $0x10] sm:$0xf]
        %v917 = vld [vmem:[#allocation10 + $0x14] sm:$0xf]
        %v918 = vld [vmem:[#allocation10 + $0x18] sm:$0xf]
        %v919 = vld [vmem:[#allocation10 + $0x1c] sm:$0xf]
        %v920 = vld [vmem:[#allocation10 + $0x20] sm:$0xf]
        %v921 = vld [vmem:[#allocation10 + $0x24] sm:$0xf]
        %v922 = vld [vmem:[#allocation10 + $0x28] sm:$0xf]
        %v923 = vld [vmem:[#allocation10 + $0x2c] sm:$0xf]
        %v924 = vld [vmem:[#allocation10 + $0x30] sm:$0xf]
        %v925 = vld [vmem:[#allocation10 + $0x34] sm:$0xf]
        %v926 = vld [vmem:[#allocation10 + $0x38] sm:$0xf]
        %v927 = vld [vmem:[#allocation10 + $0x3c] sm:$0xf]
        %v944 = vunpack.c.l.b16 %v912
        %v945 = vunpack.c.l.b16 %v913
        %v946 = vunpack.c.l.b16 %v914
        %v947 = vunpack.c.l.b16 %v915
        %v948 = vunpack.c.l.b16 %v916
        %v949 = vunpack.c.l.b16 %v917
        %v950 = vunpack.c.l.b16 %v918
        %v951 = vunpack.c.l.b16 %v919
        %v952 = vunpack.c.l.b16 %v920
        %v953 = vunpack.c.l.b16 %v921
        %v954 = vunpack.c.l.b16 %v922
        %v955 = vunpack.c.l.b16 %v923
        %v956 = vunpack.c.l.b16 %v924
        %v957 = vunpack.c.l.b16 %v925
        %v958 = vunpack.c.l.b16 %v926
        %v959 = vunpack.c.l.b16 %v927
        %v960 = vpack.c.b16 %v945, %v944
        %v961 = vpack.c.b16 %v947, %v946
        %v962 = vpack.c.b16 %v949, %v948
        %v963 = vpack.c.b16 %v951, %v950
        %v964 = vpack.c.b16 %v953, %v952
        %v965 = vpack.c.b16 %v955, %v954
        %v966 = vpack.c.b16 %v957, %v956
        %v967 = vpack.c.b16 %v959, %v958
        %976 = vmatpush.bf16.msra.mxu0 %v967
        %977 = vmatpush.bf16.msra.mxu0 %v966
        %978 = vmatpush.bf16.msra.mxu0 %v965
        %979 = vmatpush.bf16.msra.mxu0 %v964
        %980 = vmatpush.bf16.msra.mxu0 %v963
        %981 = vmatpush.bf16.msra.mxu0 %v962
        %982 = vmatpush.bf16.msra.mxu0 %v961
        %983 = vmatpush.bf16.msra.mxu0 %v960
        %984 = vmatmul.bf16.gmra.mxu0 %v904
        %v985 = vpop.f32.mrf.mxu0
        %v986 = vadd.f32 0.0, %v985
        %v987 = vpop.f32.mrf.mxu0
        %v988 = vadd.f32 0.0, %v987
        %989 = vmatmul.bf16.gmra.mxu0 %v905
        %v990 = vpop.f32.mrf.mxu0
        %v991 = vadd.f32 0.0, %v990
        %v992 = vpop.f32.mrf.mxu0
        %v993 = vadd.f32 0.0, %v992
        %994 = vmatmul.bf16.gmra.mxu0 %v906
        %v995 = vpop.f32.mrf.mxu0
        %v996 = vadd.f32 0.0, %v995
        %v997 = vpop.f32.mrf.mxu0
        %v998 = vadd.f32 0.0, %v997
        %999 = vmatmul.bf16.gmra.mxu0 %v907
        %v1000 = vpop.f32.mrf.mxu0
        %v1001 = vadd.f32 0.0, %v1000
        %v1002 = vpop.f32.mrf.mxu0
        %v1003 = vadd.f32 0.0, %v1002
        %1004 = vmatmul.bf16.gmra.mxu0 %v908
        %v1005 = vpop.f32.mrf.mxu0
        %v1006 = vadd.f32 0.0, %v1005
        %v1007 = vpop.f32.mrf.mxu0
        %v1008 = vadd.f32 0.0, %v1007
        %1009 = vmatmul.bf16.gmra.mxu0 %v909
        %v1010 = vpop.f32.mrf.mxu0
        %v1011 = vadd.f32 0.0, %v1010
        %v1012 = vpop.f32.mrf.mxu0
        %v1013 = vadd.f32 0.0, %v1012
        %1014 = vmatmul.bf16.gmra.mxu0 %v910
        %v1015 = vpop.f32.mrf.mxu0
        %v1016 = vadd.f32 0.0, %v1015
        %v1017 = vpop.f32.mrf.mxu0
        %v1018 = vadd.f32 0.0, %v1017
        %1019 = vmatmul.bf16.gmra.mxu0 %v911
        %v1020 = vpop.f32.mrf.mxu0
        %v1021 = vadd.f32 0.0, %v1020
        %v1022 = vpop.f32.mrf.mxu0
        %v1023 = vadd.f32 0.0, %v1022
        %1024 = vdwg.mxu0
        %v1025 = vpack.c.bf16 %v988, %v986
        %v1026 = vpack.c.bf16 %v993, %v991
        %v1027 = vpack.c.bf16 %v998, %v996
        %v1028 = vpack.c.bf16 %v1003, %v1001
        %v1029 = vpack.c.bf16 %v1008, %v1006
        %v1030 = vpack.c.bf16 %v1013, %v1011
        %v1031 = vpack.c.bf16 %v1018, %v1016
        %v1032 = vpack.c.bf16 %v1023, %v1021
        %v1033 = vperm.slane %v482, 0
        %1034 = vmatpush.bf16.msra.mxu0 %v1032
        %1035 = vmatpush.bf16.msra.mxu0 %v1031
        %1036 = vmatpush.bf16.msra.mxu0 %v1030
        %1037 = vmatpush.bf16.msra.mxu0 %v1029
        %1038 = vmatpush.bf16.msra.mxu0 %v1028
        %1039 = vmatpush.bf16.msra.mxu0 %v1027
        %1040 = vmatpush.bf16.msra.mxu0 %v1026
        %1041 = vmatpush.bf16.msra.mxu0 %v1025
        %1042 = vmatmul.bf16.gmra.mxu0 %v823
        %v1043 = vpop.f32.mrf.mxu0
        %v1044 = vadd.f32 %v1033, %v1043
        %v1045 = vpop.f32.mrf.mxu0
        %v1046 = vadd.f32 %v1033, %v1045
        %1047 = vmatmul.bf16.gmra.mxu0 %v824
        %v1048 = vpop.f32.mrf.mxu0
        %v1049 = vadd.f32 %v1033, %v1048
        %v1050 = vpop.f32.mrf.mxu0
        %v1051 = vadd.f32 %v1033, %v1050
        %1052 = vmatmul.bf16.gmra.mxu0 %v825
        %v1053 = vpop.f32.mrf.mxu0
        %v1054 = vadd.f32 %v1033, %v1053
        %v1055 = vpop.f32.mrf.mxu0
        %v1056 = vadd.f32 %v1033, %v1055
        %1057 = vmatmul.bf16.gmra.mxu0 %v826
        %v1058 = vpop.f32.mrf.mxu0
        %v1059 = vadd.f32 %v1033, %v1058
        %v1060 = vpop.f32.mrf.mxu0
        %v1061 = vadd.f32 %v1033, %v1060
        %1062 = vmatmul.bf16.gmra.mxu0 %v827
        %v1063 = vpop.f32.mrf.mxu0
        %v1064 = vadd.f32 %v1033, %v1063
        %v1065 = vpop.f32.mrf.mxu0
        %v1066 = vadd.f32 %v1033, %v1065
        %1067 = vmatmul.bf16.gmra.mxu0 %v828
        %v1068 = vpop.f32.mrf.mxu0
        %v1069 = vadd.f32 %v1033, %v1068
        %v1070 = vpop.f32.mrf.mxu0
        %v1071 = vadd.f32 %v1033, %v1070
        %1072 = vmatmul.bf16.gmra.mxu0 %v829
        %v1073 = vpop.f32.mrf.mxu0
        %v1074 = vadd.f32 %v1033, %v1073
        %v1075 = vpop.f32.mrf.mxu0
        %v1076 = vadd.f32 %v1033, %v1075
        %1077 = vmatmul.bf16.gmra.mxu0 %v830
        %v1078 = vpop.f32.mrf.mxu0
        %v1079 = vadd.f32 %v1033, %v1078
        %v1080 = vpop.f32.mrf.mxu0
        %v1081 = vadd.f32 %v1033, %v1080
        %1082 = vdwg.mxu0
        %v1083 = vmax.f32 %v1044, 0.0
        %v1084 = vmax.f32 %v1046, 0.0
        %v1085 = vmax.f32 %v1049, 0.0
        %v1086 = vmax.f32 %v1051, 0.0
        %v1087 = vmax.f32 %v1054, 0.0
        %v1088 = vmax.f32 %v1056, 0.0
        %v1089 = vmax.f32 %v1059, 0.0
        %v1090 = vmax.f32 %v1061, 0.0
        %v1091 = vmax.f32 %v1064, 0.0
        %v1092 = vmax.f32 %v1066, 0.0
        %v1093 = vmax.f32 %v1069, 0.0
        %v1094 = vmax.f32 %v1071, 0.0
        %v1095 = vmax.f32 %v1074, 0.0
        %v1096 = vmax.f32 %v1076, 0.0
        %v1097 = vmax.f32 %v1079, 0.0
        %v1098 = vmax.f32 %v1081, 0.0
        %v1099 = vpack.c.bf16 %v1084, %v1083
        %v1100 = vpack.c.bf16 %v1086, %v1085
        %v1101 = vpack.c.bf16 %v1088, %v1087
        %v1102 = vpack.c.bf16 %v1090, %v1089
        %v1103 = vpack.c.bf16 %v1092, %v1091
        %v1104 = vpack.c.bf16 %v1094, %v1093
        %v1105 = vpack.c.bf16 %v1096, %v1095
        %v1106 = vpack.c.bf16 %v1098, %v1097
        %v1107 = vld [vmem:[#allocation11] sm:$0xf]
        %v1108 = vld [vmem:[#allocation11 + $0x4] sm:$0xf]
        %v1109 = vld [vmem:[#allocation11 + $0x8] sm:$0xf]
        %v1110 = vld [vmem:[#allocation11 + $0xc] sm:$0xf]
        %v1111 = vld [vmem:[#allocation11 + $0x10] sm:$0xf]
        %v1112 = vld [vmem:[#allocation11 + $0x14] sm:$0xf]
        %v1113 = vld [vmem:[#allocation11 + $0x18] sm:$0xf]
        %v1114 = vld [vmem:[#allocation11 + $0x1c] sm:$0xf]
        %v1115 = vld [vmem:[#allocation11 + $0x20] sm:$0xf]
        %v1116 = vld [vmem:[#allocation11 + $0x24] sm:$0xf]
        %v1117 = vld [vmem:[#allocation11 + $0x28] sm:$0xf]
        %v1118 = vld [vmem:[#allocation11 + $0x2c] sm:$0xf]
        %v1119 = vld [vmem:[#allocation11 + $0x30] sm:$0xf]
        %v1120 = vld [vmem:[#allocation11 + $0x34] sm:$0xf]
        %v1121 = vld [vmem:[#allocation11 + $0x38] sm:$0xf]
        %v1122 = vld [vmem:[#allocation11 + $0x3c] sm:$0xf]
        %v1123 = vld [vmem:[%s7] sm:$0x1]
        %v1125 = vperm.slane %v1123, 0
        %v1143 = vunpack.c.l.b16 %v1107
        %v1144 = vunpack.c.l.b16 %v1108
        %v1145 = vunpack.c.l.b16 %v1109
        %v1146 = vunpack.c.l.b16 %v1110
        %v1147 = vunpack.c.l.b16 %v1111
        %v1148 = vunpack.c.l.b16 %v1112
        %v1149 = vunpack.c.l.b16 %v1113
        %v1150 = vunpack.c.l.b16 %v1114
        %v1151 = vunpack.c.l.b16 %v1115
        %v1152 = vunpack.c.l.b16 %v1116
        %v1153 = vunpack.c.l.b16 %v1117
        %v1154 = vunpack.c.l.b16 %v1118
        %v1155 = vunpack.c.l.b16 %v1119
        %v1156 = vunpack.c.l.b16 %v1120
        %v1157 = vunpack.c.l.b16 %v1121
        %v1158 = vunpack.c.l.b16 %v1122
        %v1159 = vpack.c.b16 %v1144, %v1143
        %v1160 = vpack.c.b16 %v1146, %v1145
        %v1161 = vpack.c.b16 %v1148, %v1147
        %v1162 = vpack.c.b16 %v1150, %v1149
        %v1163 = vpack.c.b16 %v1152, %v1151
        %v1164 = vpack.c.b16 %v1154, %v1153
        %v1165 = vpack.c.b16 %v1156, %v1155
        %v1166 = vpack.c.b16 %v1158, %v1157
        %1175 = vmatpush.bf16.msra.mxu0 %v1166
        %1176 = vmatpush.bf16.msra.mxu0 %v1165
        %1177 = vmatpush.bf16.msra.mxu0 %v1164
        %1178 = vmatpush.bf16.msra.mxu0 %v1163
        %1179 = vmatpush.bf16.msra.mxu0 %v1162
        %1180 = vmatpush.bf16.msra.mxu0 %v1161
        %1181 = vmatpush.bf16.msra.mxu0 %v1160
        %1182 = vmatpush.bf16.msra.mxu0 %v1159
        %1183 = vmatmul.bf16.gmra.mxu0 %v1099
        %v1184 = vpop.f32.mrf.mxu0
        %v1185 = vadd.f32 %v1125, %v1184
        %v1186 = vpop.f32.mrf.mxu0
        %v1187 = vadd.f32 %v1125, %v1186
        %1188 = vmatmul.bf16.gmra.mxu0 %v1100
        %v1189 = vpop.f32.mrf.mxu0
        %v1190 = vadd.f32 %v1125, %v1189
        %v1191 = vpop.f32.mrf.mxu0
        %v1192 = vadd.f32 %v1125, %v1191
        %1193 = vmatmul.bf16.gmra.mxu0 %v1101
        %v1194 = vpop.f32.mrf.mxu0
        %v1195 = vadd.f32 %v1125, %v1194
        %v1196 = vpop.f32.mrf.mxu0
        %v1197 = vadd.f32 %v1125, %v1196
        %1198 = vmatmul.bf16.gmra.mxu0 %v1102
        %v1199 = vpop.f32.mrf.mxu0
        %v1200 = vadd.f32 %v1125, %v1199
        %v1201 = vpop.f32.mrf.mxu0
        %v1202 = vadd.f32 %v1125, %v1201
        %1203 = vmatmul.bf16.gmra.mxu0 %v1103
        %v1204 = vpop.f32.mrf.mxu0
        %v1205 = vadd.f32 %v1125, %v1204
        %v1206 = vpop.f32.mrf.mxu0
        %v1207 = vadd.f32 %v1125, %v1206
        %1208 = vmatmul.bf16.gmra.mxu0 %v1104
        %v1209 = vpop.f32.mrf.mxu0
        %v1210 = vadd.f32 %v1125, %v1209
        %v1211 = vpop.f32.mrf.mxu0
        %v1212 = vadd.f32 %v1125, %v1211
        %1213 = vmatmul.bf16.gmra.mxu0 %v1105
        %v1214 = vpop.f32.mrf.mxu0
        %v1215 = vadd.f32 %v1125, %v1214
        %v1216 = vpop.f32.mrf.mxu0
        %v1217 = vadd.f32 %v1125, %v1216
        %1218 = vmatmul.bf16.gmra.mxu0 %v1106
        %v1219 = vpop.f32.mrf.mxu0
        %v1220 = vadd.f32 %v1125, %v1219
        %v1221 = vpop.f32.mrf.mxu0
        %v1222 = vadd.f32 %v1125, %v1221
        %1223 = vdwg.mxu0
        %1224 = vmax.xlane.f32.xlu0 %v1185
        %v1225 = vpop.xlane.xlu0 %1224
        %1226 = vmax.xlane.f32.xlu0 %v1187
        %v1227 = vpop.xlane.xlu0 %1226
        %1228 = vmax.xlane.f32.xlu0 %v1190
        %v1229 = vpop.xlane.xlu0 %1228
        %1230 = vmax.xlane.f32.xlu0 %v1192
        %v1231 = vpop.xlane.xlu0 %1230
        %1232 = vmax.xlane.f32.xlu0 %v1195
        %v1233 = vpop.xlane.xlu0 %1232
        %1234 = vmax.xlane.f32.xlu0 %v1197
        %v1235 = vpop.xlane.xlu0 %1234
        %1236 = vmax.xlane.f32.xlu0 %v1200
        %v1237 = vpop.xlane.xlu0 %1236
        %1238 = vmax.xlane.f32.xlu0 %v1202
        %v1239 = vpop.xlane.xlu0 %1238
        %1240 = vmax.xlane.f32.xlu0 %v1205
        %v1241 = vpop.xlane.xlu0 %1240
        %1242 = vmax.xlane.f32.xlu0 %v1207
        %v1243 = vpop.xlane.xlu0 %1242
        %1244 = vmax.xlane.f32.xlu0 %v1210
        %v1245 = vpop.xlane.xlu0 %1244
        %1246 = vmax.xlane.f32.xlu0 %v1212
        %v1247 = vpop.xlane.xlu0 %1246
        %1248 = vmax.xlane.f32.xlu0 %v1215
        %v1249 = vpop.xlane.xlu0 %1248
        %1250 = vmax.xlane.f32.xlu0 %v1217
        %v1251 = vpop.xlane.xlu0 %1250
        %1252 = vmax.xlane.f32.xlu0 %v1220
        %v1253 = vpop.xlane.xlu0 %1252
        %1254 = vmax.xlane.f32.xlu0 %v1222
        %v1255 = vpop.xlane.xlu0 %1254
        %v1256 = vsub.f32 %v1185, %v1225
        %v1257 = vsub.f32 %v1187, %v1227
        %v1258 = vsub.f32 %v1190, %v1229
        %v1259 = vsub.f32 %v1192, %v1231
        %v1260 = vsub.f32 %v1195, %v1233
        %v1261 = vsub.f32 %v1197, %v1235
        %v1262 = vsub.f32 %v1200, %v1237
        %v1263 = vsub.f32 %v1202, %v1239
        %v1264 = vsub.f32 %v1205, %v1241
        %v1265 = vsub.f32 %v1207, %v1243
        %v1266 = vsub.f32 %v1210, %v1245
        %v1267 = vsub.f32 %v1212, %v1247
        %v1268 = vsub.f32 %v1215, %v1249
        %v1269 = vsub.f32 %v1217, %v1251
        %v1270 = vsub.f32 %v1220, %v1253
        %v1271 = vsub.f32 %v1222, %v1255
        %v1272 = vmul.f32 %v1256, 1.442695
        %v1273 = vpow.pop %v1272
        %v1274 = vmul.f32 %v1257, 1.442695
        %v1275 = vpow.pop %v1274
        %v1276 = vmul.f32 %v1258, 1.442695
        %v1277 = vpow.pop %v1276
        %v1278 = vmul.f32 %v1259, 1.442695
        %v1279 = vpow.pop %v1278
        %v1280 = vmul.f32 %v1260, 1.442695
        %v1281 = vpow.pop %v1280
        %v1282 = vmul.f32 %v1261, 1.442695
        %v1283 = vpow.pop %v1282
        %v1284 = vmul.f32 %v1262, 1.442695
        %v1285 = vpow.pop %v1284
        %v1286 = vmul.f32 %v1263, 1.442695
        %v1287 = vpow.pop %v1286
        %v1288 = vmul.f32 %v1264, 1.442695
        %v1289 = vpow.pop %v1288
        %v1290 = vmul.f32 %v1265, 1.442695
        %v1291 = vpow.pop %v1290
        %v1292 = vmul.f32 %v1266, 1.442695
        %v1293 = vpow.pop %v1292
        %v1294 = vmul.f32 %v1267, 1.442695
        %v1295 = vpow.pop %v1294
        %v1296 = vmul.f32 %v1268, 1.442695
        %v1297 = vpow.pop %v1296
        %v1298 = vmul.f32 %v1269, 1.442695
        %v1299 = vpow.pop %v1298
        %v1300 = vmul.f32 %v1270, 1.442695
        %v1301 = vpow.pop %v1300
        %v1302 = vmul.f32 %v1271, 1.442695
        %v1303 = vpow.pop %v1302
        %1304 = vadd.xlane.f32.xlu0 %v1273
        %v1305 = vpop.xlane.xlu0 %1304
        %1306 = vadd.xlane.f32.xlu0 %v1275
        %v1307 = vpop.xlane.xlu0 %1306
        %1308 = vadd.xlane.f32.xlu0 %v1277
        %v1309 = vpop.xlane.xlu0 %1308
        %1310 = vadd.xlane.f32.xlu0 %v1279
        %v1311 = vpop.xlane.xlu0 %1310
        %1312 = vadd.xlane.f32.xlu0 %v1281
        %v1313 = vpop.xlane.xlu0 %1312
        %1314 = vadd.xlane.f32.xlu0 %v1283
        %v1315 = vpop.xlane.xlu0 %1314
        %1316 = vadd.xlane.f32.xlu0 %v1285
        %v1317 = vpop.xlane.xlu0 %1316
        %1318 = vadd.xlane.f32.xlu0 %v1287
        %v1319 = vpop.xlane.xlu0 %1318
        %1320 = vadd.xlane.f32.xlu0 %v1289
        %v1321 = vpop.xlane.xlu0 %1320
        %1322 = vadd.xlane.f32.xlu0 %v1291
        %v1323 = vpop.xlane.xlu0 %1322
        %1324 = vadd.xlane.f32.xlu0 %v1293
        %v1325 = vpop.xlane.xlu0 %1324
        %1326 = vadd.xlane.f32.xlu0 %v1295
        %v1327 = vpop.xlane.xlu0 %1326
        %1328 = vadd.xlane.f32.xlu0 %v1297
        %v1329 = vpop.xlane.xlu0 %1328
        %1330 = vadd.xlane.f32.xlu0 %v1299
        %v1331 = vpop.xlane.xlu0 %1330
        %1332 = vadd.xlane.f32.xlu0 %v1301
        %v1333 = vpop.xlane.xlu0 %1332
        %1334 = vadd.xlane.f32.xlu0 %v1303
        %v1335 = vpop.xlane.xlu0 %1334
        %v1336 = vlog2.pop %v1305
        %v1337 = vmul.f32 %v1336, 0.6931472
        %v1338 = vlog2.pop %v1307
        %v1339 = vmul.f32 %v1338, 0.6931472
        %v1340 = vlog2.pop %v1309
        %v1341 = vmul.f32 %v1340, 0.6931472
        %v1342 = vlog2.pop %v1311
        %v1343 = vmul.f32 %v1342, 0.6931472
        %v1344 = vlog2.pop %v1313
        %v1345 = vmul.f32 %v1344, 0.6931472
        %v1346 = vlog2.pop %v1315
        %v1347 = vmul.f32 %v1346, 0.6931472
        %v1348 = vlog2.pop %v1317
        %v1349 = vmul.f32 %v1348, 0.6931472
        %v1350 = vlog2.pop %v1319
        %v1351 = vmul.f32 %v1350, 0.6931472
        %v1352 = vlog2.pop %v1321
        %v1353 = vmul.f32 %v1352, 0.6931472
        %v1354 = vlog2.pop %v1323
        %v1355 = vmul.f32 %v1354, 0.6931472
        %v1356 = vlog2.pop %v1325
        %v1357 = vmul.f32 %v1356, 0.6931472
        %v1358 = vlog2.pop %v1327
        %v1359 = vmul.f32 %v1358, 0.6931472
        %v1360 = vlog2.pop %v1329
        %v1361 = vmul.f32 %v1360, 0.6931472
        %v1362 = vlog2.pop %v1331
        %v1363 = vmul.f32 %v1362, 0.6931472
        %v1364 = vlog2.pop %v1333
        %v1365 = vmul.f32 %v1364, 0.6931472
        %v1366 = vlog2.pop %v1335
        %v1367 = vmul.f32 %v1366, 0.6931472
        %v1368 = vsub.f32 %v1256, %v1337
        %v1369 = vsub.f32 %v1257, %v1339
        %v1370 = vsub.f32 %v1258, %v1341
        %v1371 = vsub.f32 %v1259, %v1343
        %v1372 = vsub.f32 %v1260, %v1345
        %v1373 = vsub.f32 %v1261, %v1347
        %v1374 = vsub.f32 %v1262, %v1349
        %v1375 = vsub.f32 %v1263, %v1351
        %v1376 = vsub.f32 %v1264, %v1353
        %v1377 = vsub.f32 %v1265, %v1355
        %v1378 = vsub.f32 %v1266, %v1357
        %v1379 = vsub.f32 %v1267, %v1359
        %v1380 = vsub.f32 %v1268, %v1361
        %v1381 = vsub.f32 %v1269, %v1363
        %v1382 = vsub.f32 %v1270, %v1365
        %v1383 = vsub.f32 %v1271, %v1367
        %1384 = vst [vmem:[%s447] sm:$0xff] %v1368
        %1385 = vst [vmem:[%s447 + $0x8] sm:$0xff] %v1369
        %1386 = vst [vmem:[%s447 + $0x10] sm:$0xff] %v1370
        %1387 = vst [vmem:[%s447 + $0x18] sm:$0xff] %v1371
        %1388 = vst [vmem:[%s447 + $0x20] sm:$0xff] %v1372
        %1389 = vst [vmem:[%s447 + $0x28] sm:$0xff] %v1373
        %1390 = vst [vmem:[%s447 + $0x30] sm:$0xff] %v1374
        %1391 = vst [vmem:[%s447 + $0x38] sm:$0xff] %v1375
        %1392 = vst [vmem:[%s447 + $0x40] sm:$0xff] %v1376
        %1393 = vst [vmem:[%s447 + $0x48] sm:$0xff] %v1377
        %1394 = vst [vmem:[%s447 + $0x50] sm:$0xff] %v1378
        %1395 = vst [vmem:[%s447 + $0x58] sm:$0xff] %v1379
        %1396 = vst [vmem:[%s447 + $0x60] sm:$0xff] %v1380
        %1397 = vst [vmem:[%s447 + $0x68] sm:$0xff] %v1381
        %1398 = vst [vmem:[%s447 + $0x70] sm:$0xff] %v1382
        %1399 = vst [vmem:[%s447 + $0x78] sm:$0xff] %v1383
        %s1400 = sand.u32 %s216, 1
        %s1401 = scalar_lea.sflag [#allocation4], %s1400
        %s1402 = sand.u32 %s216, 1
        %s1403 = smul.addr %s1402, 128
        %s1404 = scalar_lea.vmem [#allocation14], %s1403
        // Predicated region
        $region81: #{tpu_custom_call.1} parent=51 // pred_check
          %p1405 = pneg %p226
        $region82: #{tpu_custom_call.1} parent=51 // pred_check_branch
          %1407 = sbr.rel (%p1405) target = $region84
        $region83: #{tpu_custom_call.1} parent=51 // pred_region
          %1409 = vsyncadd %s1401, 0
          %s1410 = smul.addr %s30, 16
          %s1411 = smul.addr %s1410, 8
          %s1412 = scalar_lea.hbm %s8, %s1411
          %s1413 = sshll.u32 %s1404, 4
          %s1414 = int_to_ptr.vmem [resolvable:$true] %s1413
          %s1415 = sshll.u32 %s1412, 4
          %s1416 = int_to_ptr.hbm [resolvable:$true] %s1415
          %1421 = dma.vmem_to_hbm [thread:$0]  %s1414, 2048, %s1416, %s1401, 128, 128, 8
        $region84: #{tpu_custom_call.1} parent=51 // pred_fallthru
          _
      $region52: #{tpu_custom_call.1} parent=5 // pred_fallthru
        _
      %p1422 = scmp.le.s32.totalorder 2, %s25
      // Predicated region
      $region85: #{tpu_custom_call.1} parent=5 // pred_check
        %p1423 = pneg %p1422
      $region86: #{tpu_custom_call.1} parent=5 // pred_check_branch
        %1425 = sbr.rel (%p1423) target = $region88
      $region87: #{tpu_custom_call.1} parent=5 // pred_region
        %s1426 = ssub.s32 %s25, 2
        // Predicated region
        $region89: #{tpu_custom_call.1} parent=87 // pred_check
          %p1427 = pneg %p232
        $region90: #{tpu_custom_call.1} parent=87 // pred_check_branch
          %1429 = sbr.rel (%p1427) target = $region92
        $region91: #{tpu_custom_call.1} parent=87 // pred_region
          %s1430 = sand.u32 %s217, 1
          %s1431 = scalar_lea.sflag [#allocation4], %s1430
          %s1432 = sand.u32 %s217, 1
          %s1433 = smul.addr %s1432, 128
          %s1434 = scalar_lea.vmem [#allocation14], %s1433
          %1436 = dma.done %s1431, 2048
        $region92: #{tpu_custom_call.1} parent=87 // pred_fallthru
          _
      $region88: #{tpu_custom_call.1} parent=5 // pred_fallthru
        _
    $region6: #{tpu_custom_call.1} parent=1 // loop_footer
      %s29 = sadd.s32 1, %s25
    $region7: #{tpu_custom_call.1} parent=1 // loop_footer_branch
      %24 = sbr.rel target = $region3
    $region8: #{tpu_custom_call.1} parent=1 // loop_exit
      _
    %1437 = vsyncpa [#allocation3], 1
    %s1438 = scalar_lea.sflag [#allocation3], 1
    %1439 = vsyncpa %s1438, 1
    %1440 = vsyncpa [#allocation6], 1
    %s1441 = scalar_lea.sflag [#allocation6], 1
    %1442 = vsyncpa %s1441, 1
    %1443 = vsyncpa [#allocation9], 1
    %1444 = vsyncpa [#allocation12], 1
    %1445 = vsyncpa [#allocation4], 1
    %s1446 = scalar_lea.sflag [#allocation4], 1
    %1447 = vsyncpa %s1446, 1

</llo_original>
